<compile_context>
chip_gen: v7x
topology: tpu7x:2x2x1
jax: 0.10.0
libtpu: 0.0.40
codegen_flags: <defaults>
</compile_context>

<pallas_src>
import functools

import jax
import jax.numpy as jnp
from jax import lax
from jax.experimental import pallas as pl
from jax.experimental.pallas import tpu as pltpu

_LANE = 128


def _round_up(x, m):
    return (x + m - 1) // m * m


def conv_block_kernel(x_ref, w_ref, b_ref, o_ref, *, H, W):
    # x_ref: (1, H+2, W+2, Cin)  spatially pre-padded NHWC tile (one batch elem)
    # w_ref: (9*Cin, Cp)         conv weights, tap-major ((ky,kx,Cin) flattened),
    #                            Cout zero-padded to Cp (multiple of 128)
    # b_ref: (1, Cp)             conv bias (padded)
    # o_ref: (1, H*W, Cp)        lane-dense flat-spatial output
    Cin = x_ref.shape[3]
    Cp = o_ref.shape[2]

    x = x_ref[0]  # (H+2, W+2, Cin) — single load, 9 in-register shifted views

    # --- im2col + single MXU matmul -------------------------------------
    # (ky, kx, Cin) lane-axis order matches w_ref's row order; K = 9*Cin.
    taps = [x[ky:ky + H, kx:kx + W, :] for ky in range(3) for kx in range(3)]
    lhs = jnp.concatenate(taps, axis=-1).reshape(H * W, 9 * Cin)
    y = jnp.dot(lhs, w_ref[...], preferred_element_type=jnp.float32)
    y = y + b_ref[...]                                     # (H*W, Cp)

    # --- InstanceNorm2d (affine=False, eps=1e-5, biased var), one pass ---
    inv_n = 1.0 / (H * W)
    mean = jnp.sum(y, axis=0, keepdims=True) * inv_n        # (1, Cp)
    ex2 = jnp.sum(y * y, axis=0, keepdims=True) * inv_n     # (1, Cp)
    var = jnp.maximum(ex2 - mean * mean, 0.0)               # guard cancellation
    y = (y - mean) * lax.rsqrt(var + 1e-5)

    # --- LeakyReLU(0.2) ---------------------------------------------------
    y = jnp.where(y > 0, y, 0.2 * y)

    o_ref[0] = y.astype(o_ref.dtype)


def conv_block(x_nchw, weight_oihw, bias):
    """Forward pass matching the PyTorch ConvBlock.

    x_nchw:      (B, Cin, H, W)    float32
    weight_oihw: (Cout, Cin, 3, 3) float32  (PyTorch Conv2d layout)
    bias:        (Cout,)           float32
    returns:     (B, Cout, H, W)   float32
    """
    B, Cin, H, W = x_nchw.shape
    Cout = weight_oihw.shape[0]
    Cp = _round_up(Cout, _LANE)

    # Layout glue (NCHW API contract): NHWC + 1px zero halo; XLA fuses these.
    x_nhwc = jnp.transpose(x_nchw, (0, 2, 3, 1))                   # (B,H,W,Cin)
    x_pad = jnp.pad(x_nhwc, ((0, 0), (1, 1), (1, 1), (0, 0)))      # (B,H+2,W+2,Cin)

    # (Cout,Cin,kh,kw) -> (kh,kw,Cin,Cout) -> (9*Cin, Cout), tap-major, then
    # zero-pad Cout up to a lane multiple (dense stores, full MXU columns).
    w_flat = jnp.transpose(weight_oihw, (2, 3, 1, 0)).reshape(9 * Cin, Cout)
    w_flat = jnp.pad(w_flat, ((0, 0), (0, Cp - Cout)))             # (9*Cin, Cp)
    b_flat = jnp.pad(bias.reshape(1, Cout), ((0, 0), (0, Cp - Cout)))

    flops = 2 * B * H * W * (9 * Cin) * Cp + 8 * B * H * W * Cp
    bytes_accessed = 4 * (x_pad.size + w_flat.size + b_flat.size + B * H * W * Cp)
    cost = pl.CostEstimate(flops=flops,
                           transcendentals=B * Cp,
                           bytes_accessed=bytes_accessed)

    kernel = functools.partial(conv_block_kernel, H=H, W=W)

    out_flat = pl.pallas_call(
        kernel,
        out_shape=jax.ShapeDtypeStruct((B, H * W, Cp), jnp.float32),
        grid_spec=pltpu.PrefetchScalarGridSpec(
            num_scalar_prefetch=0,
            grid=(B,),
            in_specs=[
                pl.BlockSpec((1, H + 2, W + 2, Cin), lambda b: (b, 0, 0, 0)),
                pl.BlockSpec((9 * Cin, Cp), lambda b: (0, 0)),
                pl.BlockSpec((1, Cp), lambda b: (0, 0)),
            ],
            out_specs=pl.BlockSpec((1, H * W, Cp), lambda b: (b, 0, 0)),
        ),
        compiler_params=pltpu.CompilerParams(
            dimension_semantics=("parallel",),
            vmem_limit_bytes=32 * 1024 * 1024),
        cost_estimate=cost,
    )(x_pad, w_flat, b_flat)

    # Strip channel padding, back to NCHW.
    out_nhwc = out_flat.reshape(B, H, W, Cp)[..., :Cout]
    return jnp.transpose(out_nhwc, (0, 3, 1, 2))


def reference(x_nchw, weight_oihw, bias):
    """Pure-JAX reference (lax conv + instance norm + leaky relu)."""
    y = lax.conv_general_dilated(
        x_nchw, weight_oihw, window_strides=(1, 1), padding=((1, 1), (1, 1)),
        dimension_numbers=("NCHW", "OIHW", "NCHW"))
    y = y + bias[None, :, None, None]
    mean = jnp.mean(y, axis=(2, 3), keepdims=True)
    var = jnp.mean((y - mean) ** 2, axis=(2, 3), keepdims=True)
    y = (y - mean) * lax.rsqrt(var + 1e-5)
    return jnp.where(y > 0, y, 0.2 * y)


if __name__ == "__main__":
    B, Cin, Cout, H, W = 2, 4, 8, 16, 16

    key = jax.random.PRNGKey(0)
    kx, kw, kb = jax.random.split(key, 3)

    x = jax.random.normal(kx, (B, Cin, H, W), dtype=jnp.float32)
    # Deterministic Conv2d-style init (uniform in +-1/sqrt(fan_in)).
    fan_in = Cin * 3 * 3
    bound = 1.0 / (fan_in ** 0.5)
    weight = jax.random.uniform(kw, (Cout, Cin, 3, 3), jnp.float32, -bound, bound)
    bias = jax.random.uniform(kb, (Cout,), jnp.float32, -bound, bound)

    out = conv_block(x, weight, bias)
    out = jax.block_until_ready(out)

    ref = reference(x, weight, bias)
    assert out.shape == (B, Cout, H, W)
    assert jnp.allclose(out, ref, atol=1e-4, rtol=1e-4), "mismatch vs reference"

    print("KERNEL_OK")
</pallas_src>

<mosaic_0001>
module attributes {stable_mosaic.version = 11 : i64} {
  func.func @conv_block_kernel(%arg0: i32, %arg1: memref<1x18x18x4xf32, #tpu.memory_space<vmem>>, %arg2: memref<36x128xf32, #tpu.memory_space<vmem>>, %arg3: memref<1x128xf32, #tpu.memory_space<vmem>>, %arg4: memref<1x256x128xf32, #tpu.memory_space<vmem>>) attributes {dimension_semantics = [#tpu.dimension_semantics<parallel>], iteration_bounds = array<i64: 2>, scalar_prefetch = 0 : i64, scratch_operands = 0 : i64, tpu.core_type = #tpu.core_type<tc>, window_params = [{transform_indices = @transform_0, window_bounds = array<i64: 1, 18, 18, 4>}, {pipeline_mode = #tpu.pipeline_mode<synchronous>, transform_indices = @transform_1, window_bounds = array<i64: 36, 128>}, {pipeline_mode = #tpu.pipeline_mode<synchronous>, transform_indices = @transform_2, window_bounds = array<i64: 1, 128>}, {transform_indices = @transform_3, window_bounds = array<i64: 1, 256, 128>}]} {
    %c0 = arith.constant 0 : index
    %c0_0 = arith.constant 0 : index
    %c0_1 = arith.constant 0 : index
    %c0_2 = arith.constant 0 : index
    %0 = vector.load %arg1[%c0, %c0_0, %c0_1, %c0_2] : memref<1x18x18x4xf32, #tpu.memory_space<vmem>>, vector<1x18x18x4xf32>
    %1 = vector.shape_cast %0 : vector<1x18x18x4xf32> to vector<18x18x4xf32>
    %2 = vector.extract_strided_slice %1 {offsets = [0, 0, 0], sizes = [16, 16, 4], strides = [1, 1, 1]} : vector<18x18x4xf32> to vector<16x16x4xf32>
    %3 = vector.extract_strided_slice %1 {offsets = [0, 1, 0], sizes = [16, 16, 4], strides = [1, 1, 1]} : vector<18x18x4xf32> to vector<16x16x4xf32>
    %4 = vector.extract_strided_slice %1 {offsets = [0, 2, 0], sizes = [16, 16, 4], strides = [1, 1, 1]} : vector<18x18x4xf32> to vector<16x16x4xf32>
    %5 = vector.extract_strided_slice %1 {offsets = [1, 0, 0], sizes = [16, 16, 4], strides = [1, 1, 1]} : vector<18x18x4xf32> to vector<16x16x4xf32>
    %6 = vector.extract_strided_slice %1 {offsets = [1, 1, 0], sizes = [16, 16, 4], strides = [1, 1, 1]} : vector<18x18x4xf32> to vector<16x16x4xf32>
    %7 = vector.extract_strided_slice %1 {offsets = [1, 2, 0], sizes = [16, 16, 4], strides = [1, 1, 1]} : vector<18x18x4xf32> to vector<16x16x4xf32>
    %8 = vector.extract_strided_slice %1 {offsets = [2, 0, 0], sizes = [16, 16, 4], strides = [1, 1, 1]} : vector<18x18x4xf32> to vector<16x16x4xf32>
    %9 = vector.extract_strided_slice %1 {offsets = [2, 1, 0], sizes = [16, 16, 4], strides = [1, 1, 1]} : vector<18x18x4xf32> to vector<16x16x4xf32>
    %10 = vector.extract_strided_slice %1 {offsets = [2, 2, 0], sizes = [16, 16, 4], strides = [1, 1, 1]} : vector<18x18x4xf32> to vector<16x16x4xf32>
    %11 = tpu.concatenate %2, %3, %4, %5, %6, %7, %8, %9, %10 in 2 : vector<16x16x4xf32>, vector<16x16x4xf32>, vector<16x16x4xf32>, vector<16x16x4xf32>, vector<16x16x4xf32>, vector<16x16x4xf32>, vector<16x16x4xf32>, vector<16x16x4xf32>, vector<16x16x4xf32> -> vector<16x16x36xf32>
    %12 = vector.shape_cast %11 : vector<16x16x36xf32> to vector<256x36xf32>
    %c0_3 = arith.constant 0 : index
    %c0_4 = arith.constant 0 : index
    %13 = vector.load %arg2[%c0_3, %c0_4] : memref<36x128xf32, #tpu.memory_space<vmem>>, vector<36x128xf32>
    %cst = arith.constant dense<0.000000e+00> : vector<256x128xf32>
    %14 = tpu.matmul %12, %13, %cst {dimension_numbers = #tpu.dot_dimension_numbers<[1], [0], [0], [1], [0, 0, 1, 1], [], []>} : vector<256x36xf32>, vector<36x128xf32>, vector<256x128xf32> -> vector<256x128xf32>
    %c0_5 = arith.constant 0 : index
    %c0_6 = arith.constant 0 : index
    %15 = vector.load %arg3[%c0_5, %c0_6] : memref<1x128xf32, #tpu.memory_space<vmem>>, vector<1x128xf32>
    %16 = vector.broadcast %15 : vector<1x128xf32> to vector<256x128xf32>
    %17 = arith.addf %14, %16 : vector<256x128xf32>
    %cst_7 = arith.constant dense<0.000000e+00> : vector<128xf32>
    %18 = vector.multi_reduction <add>, %17, %cst_7 [0] : vector<256x128xf32> to vector<128xf32>
    %19 = vector.shape_cast %18 : vector<128xf32> to vector<1x128xf32>
    %cst_8 = arith.constant 3.906250e-03 : f32
    %20 = vector.broadcast %cst_8 : f32 to vector<1x128xf32>
    %21 = arith.mulf %19, %20 : vector<1x128xf32>
    %22 = arith.mulf %17, %17 : vector<256x128xf32>
    %cst_9 = arith.constant dense<0.000000e+00> : vector<128xf32>
    %23 = vector.multi_reduction <add>, %22, %cst_9 [0] : vector<256x128xf32> to vector<128xf32>
    %24 = vector.shape_cast %23 : vector<128xf32> to vector<1x128xf32>
    %cst_10 = arith.constant 3.906250e-03 : f32
    %25 = vector.broadcast %cst_10 : f32 to vector<1x128xf32>
    %26 = arith.mulf %24, %25 : vector<1x128xf32>
    %27 = arith.mulf %21, %21 : vector<1x128xf32>
    %28 = arith.subf %26, %27 : vector<1x128xf32>
    %cst_11 = arith.constant 0.000000e+00 : f32
    %29 = vector.broadcast %cst_11 : f32 to vector<1x128xf32>
    %30 = arith.maximumf %28, %29 : vector<1x128xf32>
    %31 = vector.broadcast %21 : vector<1x128xf32> to vector<256x128xf32>
    %32 = arith.subf %17, %31 : vector<256x128xf32>
    %cst_12 = arith.constant 9.99999974E-6 : f32
    %33 = vector.broadcast %cst_12 : f32 to vector<1x128xf32>
    %34 = arith.addf %30, %33 : vector<1x128xf32>
    %35 = math.rsqrt %34 : vector<1x128xf32>
    %36 = vector.broadcast %35 : vector<1x128xf32> to vector<256x128xf32>
    %37 = arith.mulf %32, %36 : vector<256x128xf32>
    %cst_13 = arith.constant 0.000000e+00 : f32
    %38 = vector.broadcast %cst_13 : f32 to vector<256x128xf32>
    %39 = arith.cmpf ogt, %37, %38 : vector<256x128xf32>
    %cst_14 = arith.constant 2.000000e-01 : f32
    %40 = vector.broadcast %cst_14 : f32 to vector<256x128xf32>
    %41 = arith.mulf %40, %37 : vector<256x128xf32>
    %42 = arith.select %39, %37, %41 : vector<256x128xi1>, vector<256x128xf32>
    %c0_15 = arith.constant 0 : index
    %c0_16 = arith.constant 0 : index
    %c0_17 = arith.constant 0 : index
    %43 = vector.load %arg4[%c0_15, %c0_16, %c0_17] : memref<1x256x128xf32, #tpu.memory_space<vmem>>, vector<1x256x128xf32>
    %44 = vector.shape_cast %43 : vector<1x256x128xf32> to vector<256x128xf32>
    %45 = vector.shape_cast %42 : vector<256x128xf32> to vector<1x256x128xf32>
    tpu.vector_store %arg4[%c0_15, %c0_16, %c0_17], %45 {strides = array<i32>} : memref<1x256x128xf32, #tpu.memory_space<vmem>>, vector<1x256x128xf32>,
    return
  }
  func.func @transform_0(%arg0: i32) -> (i32, i32, i32, i32) {
    %c0_i32 = arith.constant 0 : i32
    %c0_i32_0 = arith.constant 0 : i32
    %c0_i32_1 = arith.constant 0 : i32
    %c0_i32_2 = arith.constant 0 : i32
    return %arg0, %c0_i32, %c0_i32_0, %c0_i32_1 : i32, i32, i32, i32
  }
  func.func @transform_1(%arg0: i32) -> (i32, i32) {
    %c0_i32 = arith.constant 0 : i32
    %c0_i32_0 = arith.constant 0 : i32
    %c0_i32_1 = arith.constant 0 : i32
    return %c0_i32, %c0_i32_0 : i32, i32
  }
  func.func @transform_2(%arg0: i32) -> (i32, i32) {
    %c0_i32 = arith.constant 0 : i32
    %c0_i32_0 = arith.constant 0 : i32
    %c0_i32_1 = arith.constant 0 : i32
    return %c0_i32, %c0_i32_0 : i32, i32
  }
  func.func @transform_3(%arg0: i32) -> (i32, i32, i32) {
    %c0_i32 = arith.constant 0 : i32
    %c0_i32_0 = arith.constant 0 : i32
    %c0_i32_1 = arith.constant 0 : i32
    return %arg0, %c0_i32, %c0_i32_0 : i32, i32, i32
  }
}

</mosaic_0001>

<llo_original>
// kernel: tpu_custom_call.1
$region0: #{tpu_custom_call.1}
  #allocation0 [shape = 'u32[]', space=smem, size = 0x4, offset = 0x4, fixed_abs, tag = 'smem constant byte address 0x4 - core index']
  #allocation1 [shape = 'u32[144,128]{1,0:T(1,128)}', space=vmem, size = 0x12000, scoped, tag = 'internal scratch']
  %s0 = inlined_call_operand.vmem [shape: f32[2,18,18,4], index: 0, kind: input, shape index: {}]
  %s1 = inlined_call_operand.vmem [shape: f32[36,128], index: 1, kind: input, shape index: {}]
  %s2 = inlined_call_operand.vmem [shape: f32[1,128], index: 2, kind: input, shape index: {}]
  %s3 = inlined_call_operand.hbm [shape: f32[2,256,128], index: 3, kind: output, shape index: {}]
  %s4 = sld [smem:[#allocation0]]
  $region45: #{tpu_custom_call.1} parent=0
    _
  %s6 = ssub.s32 1, %s4
  %s7 = scalar_select 0, %s6, %s4
  $region1: #{tpu_custom_call.1} parent=0
    #allocation2 [shape = 'u8[262144]{0}', space=vmem, size = 0x40000, scoped, tag = 'output window, operand 0']
    #allocation3 [shape = 's32[2]{0}', space=sflag, size = 0x8, scoped, tag = 'scoped memory for tpu_custom_call.1']
    %8 = vsyncpa [#allocation3], 0
    %s9 = scalar_lea.sflag [#allocation3], 1
    %10 = vsyncpa %s9, 0
    loop: start=0, step=1, limit=4
    $region2: #{tpu_custom_call.1} parent=1 // loop_pre_header
      _
    $region3: #{tpu_custom_call.1} parent=1 // loop_header
      %s12 = sphi 0, %s16
      %p13 = scmp.ge.s32.totalorder %s12, 4
      %s22 = sphi 0, %s24
      %s25 = sphi 0, %s22
      %s26 = sphi 0, %s25
      %s42 = sphi 0, %s26
      %s46 = sphi 0, %s46
      %s48 = sphi 0, %s46
      %s49 = sphi 0, %s48
      %s63 = sphi 0, %s49
      %s67 = sphi 0, %s67
      %s69 = sphi 0, %s67
      %s70 = sphi 0, %s69
      %s84 = sphi 0, %s70
      %s90 = sphi 0, %s92
      %s93 = sphi 0, %s90
      %s94 = sphi 0, %s93
      %s110 = sphi 0, %s94
    $region4: #{tpu_custom_call.1} parent=1 // loop_header_branch
      %15 = sbr.rel (%p13) target = $region8
    $region5: #{tpu_custom_call.1} parent=1 // loop_body
      %s17 = ssub.s32 %s12, 1
      %s18 = ssub.s32 %s12, 2
      %s19 = sadd.s32 %s12, 1
      %s20 = ssub.s32 %s12, %s19
      %p21 = scmp.eq.s32.totalorder %s20, 0
      %s23 = sadd.s32 %s22, 1
      %s24 = scalar_select %p21, %s22, %s23
      %p27 = pneg %p21
      %p28 = scmp.eq.s32.totalorder %s12, 1
      %p29 = por %p27, %p28
      %p30 = scmp.ne.s32.totalorder %s22, %s25
      %p31 = scmp.eq.s32.totalorder %s12, 0
      %p32 = por %p30, %p31
      %p33 = scmp.ne.s32.totalorder %s22, %s25
      %p34 = scmp.eq.s32.totalorder %s17, 1
      %p35 = por %p33, %p34
      %p36 = scmp.ne.s32.totalorder %s25, %s26
      %p37 = scmp.eq.s32.totalorder %s17, 0
      %p38 = por %p36, %p37
      %p39 = scmp.ne.s32.totalorder %s25, %s26
      %p40 = scmp.eq.s32.totalorder %s18, 1
      %p41 = por %p39, %p40
      %p43 = scmp.ne.s32.totalorder %s26, %s42
      %p44 = scmp.eq.s32.totalorder %s18, 0
      %p45 = por %p43, %p44
      %s47 = sadd.s32 %s46, 1
      %p50 = scmp.eq.s32.totalorder %s12, 1
      %p51 = scmp.ne.s32.totalorder %s46, %s48
      %p52 = scmp.eq.s32.totalorder %s12, 0
      %p53 = por %p51, %p52
      %p54 = scmp.ne.s32.totalorder %s46, %s48
      %p55 = scmp.eq.s32.totalorder %s17, 1
      %p56 = por %p54, %p55
      %p57 = scmp.ne.s32.totalorder %s48, %s49
      %p58 = scmp.eq.s32.totalorder %s17, 0
      %p59 = por %p57, %p58
      %p60 = scmp.ne.s32.totalorder %s48, %s49
      %p61 = scmp.eq.s32.totalorder %s18, 1
      %p62 = por %p60, %p61
      %p64 = scmp.ne.s32.totalorder %s49, %s63
      %p65 = scmp.eq.s32.totalorder %s18, 0
      %p66 = por %p64, %p65
      %s68 = sadd.s32 %s67, 1
      %p71 = scmp.eq.s32.totalorder %s12, 1
      %p72 = scmp.ne.s32.totalorder %s67, %s69
      %p73 = scmp.eq.s32.totalorder %s12, 0
      %p74 = por %p72, %p73
      %p75 = scmp.ne.s32.totalorder %s67, %s69
      %p76 = scmp.eq.s32.totalorder %s17, 1
      %p77 = por %p75, %p76
      %p78 = scmp.ne.s32.totalorder %s69, %s70
      %p79 = scmp.eq.s32.totalorder %s17, 0
      %p80 = por %p78, %p79
      %p81 = scmp.ne.s32.totalorder %s69, %s70
      %p82 = scmp.eq.s32.totalorder %s18, 1
      %p83 = por %p81, %p82
      %p85 = scmp.ne.s32.totalorder %s70, %s84
      %p86 = scmp.eq.s32.totalorder %s18, 0
      %p87 = por %p85, %p86
      %s88 = ssub.s32 %s12, %s19
      %p89 = scmp.eq.s32.totalorder %s88, 0
      %s91 = sadd.s32 %s90, 1
      %s92 = scalar_select %p89, %s90, %s91
      %p95 = pneg %p89
      %p96 = scmp.eq.s32.totalorder %s12, 1
      %p97 = por %p95, %p96
      %p98 = scmp.ne.s32.totalorder %s90, %s93
      %p99 = scmp.eq.s32.totalorder %s12, 0
      %p100 = por %p98, %p99
      %p101 = scmp.ne.s32.totalorder %s90, %s93
      %p102 = scmp.eq.s32.totalorder %s17, 1
      %p103 = por %p101, %p102
      %p104 = scmp.ne.s32.totalorder %s93, %s94
      %p105 = scmp.eq.s32.totalorder %s17, 0
      %p106 = por %p104, %p105
      %p107 = scmp.ne.s32.totalorder %s93, %s94
      %p108 = scmp.eq.s32.totalorder %s18, 1
      %p109 = por %p107, %p108
      %p111 = scmp.ne.s32.totalorder %s94, %s110
      %p112 = scmp.eq.s32.totalorder %s18, 0
      %p113 = por %p111, %p112
      %p114 = scmp.le.s32.totalorder 1, %s12
      %p115 = scmp.lt.s32.totalorder %s12, 3
      %p116 = pnand %p114, %p115
      %p117 = pneg %p116
      // Predicated region
      $region9: #{tpu_custom_call.1} parent=5 // pred_check
        _
      $region10: #{tpu_custom_call.1} parent=5 // pred_check_branch
        %119 = sbr.rel (%p116) target = $region12
      $region11: #{tpu_custom_call.1} parent=5 // pred_region
        %s120 = ssub.s32 %s12, 1
        // Predicated region
        $region13: #{tpu_custom_call.1} parent=11 // pred_check
          %p121 = pneg %p59
        $region14: #{tpu_custom_call.1} parent=11 // pred_check_branch
          %123 = sbr.rel (%p121) target = $region16
        $region15: #{tpu_custom_call.1} parent=11 // pred_region
          _
        $region16: #{tpu_custom_call.1} parent=11 // pred_fallthru
          _
        // Predicated region
        $region17: #{tpu_custom_call.1} parent=11 // pred_check
          %p124 = pneg %p80
        $region18: #{tpu_custom_call.1} parent=11 // pred_check_branch
          %126 = sbr.rel (%p124) target = $region20
        $region19: #{tpu_custom_call.1} parent=11 // pred_region
          _
        $region20: #{tpu_custom_call.1} parent=11 // pred_fallthru
          _
      $region12: #{tpu_custom_call.1} parent=5 // pred_fallthru
        _
      %p127 = scmp.lt.s32.totalorder %s12, 2
      // Predicated region
      $region21: #{tpu_custom_call.1} parent=5 // pred_check
        %p128 = pneg %p127
      $region22: #{tpu_custom_call.1} parent=5 // pred_check_branch
        %130 = sbr.rel (%p128) target = $region24
      $region23: #{tpu_custom_call.1} parent=5 // pred_region
        // Predicated region
        $region25: #{tpu_custom_call.1} parent=23 // pred_check
          %p131 = pneg %p32
        $region26: #{tpu_custom_call.1} parent=23 // pred_check_branch
          %133 = sbr.rel (%p131) target = $region28
        $region27: #{tpu_custom_call.1} parent=23 // pred_region
          %p134 = scmp.lt.s32.totalorder %s12, 1
          %s135 = scalar_select %p134, %s12, 1
          %s136 = smul.addr %s135, 54
          %s137 = smul.addr %s136, 8
          %s138 = scalar_lea.vmem %s0, %s137
        $region28: #{tpu_custom_call.1} parent=23 // pred_fallthru
          _
      $region24: #{tpu_custom_call.1} parent=5 // pred_fallthru
        _
      %p139 = scmp.le.s32.totalorder 1, %s12
      %p140 = scmp.lt.s32.totalorder %s12, 3
      %p141 = pnand %p139, %p140
      %p142 = pneg %p141
      // Predicated region
      $region29: #{tpu_custom_call.1} parent=5 // pred_check
        _
      $region30: #{tpu_custom_call.1} parent=5 // pred_check_branch
        %144 = sbr.rel (%p141) target = $region32
      $region31: #{tpu_custom_call.1} parent=5 // pred_region
        %s145 = ssub.s32 %s12, 1
        %p146 = scmp.lt.s32.totalorder %s17, 1
        %s147 = scalar_select %p146, %s17, 1
        %s148 = smul.addr %s147, 54
        %s149 = smul.addr %s148, 8
        %s150 = scalar_lea.vmem %s0, %s149
        %p151 = pneg %p38
        %p152 = pneg %p35
        %p153 = pneg %p59
        %p154 = pneg %p56
        %p155 = pneg %p80
        %p156 = pneg %p77
        %p157 = pneg %p106
        %p158 = pneg %p103
        %s159 = sand.u32 %s93, 1
        %s160 = scalar_lea.sflag [#allocation3], %s159
        %s161 = sand.u32 %s93, 1
        %s162 = smul.addr %s161, 256
        %s163 = scalar_lea.vmem [#allocation2], %s162
        %p164 = scmp.lt.s32.totalorder %s17, 1
        %s165 = scalar_select %p164, %s17, 1
        %s166 = smul.addr %s165, 54
        %s167 = smul.addr %s166, 8
        %s168 = scalar_lea.vmem %s0, %s167
        %v169 = vld [vmem:[%s168] sm:$0xff]
        %v170 = vld [vmem:[%s168 + $0x8] sm:$0xff]
        %v171 = vld [vmem:[%s168 + $0x10] sm:$0x3]
        %v172 = vld [vmem:[%s168 + $0x18] sm:$0xff]
        %v173 = vld [vmem:[%s168 + $0x20] sm:$0xff]
        %v174 = vld [vmem:[%s168 + $0x28] sm:$0x3]
        %v175 = vld [vmem:[%s168 + $0x30] sm:$0xff]
        %v176 = vld [vmem:[%s168 + $0x38] sm:$0xff]
        %v177 = vld [vmem:[%s168 + $0x40] sm:$0x3]
        %v178 = vld [vmem:[%s168 + $0x48] sm:$0xff]
        %v179 = vld [vmem:[%s168 + $0x50] sm:$0xff]
        %v180 = vld [vmem:[%s168 + $0x58] sm:$0x3]
        %v181 = vld [vmem:[%s168 + $0x60] sm:$0xff]
        %v182 = vld [vmem:[%s168 + $0x68] sm:$0xff]
        %v183 = vld [vmem:[%s168 + $0x70] sm:$0x3]
        %v184 = vld [vmem:[%s168 + $0x78] sm:$0xff]
        %v185 = vld [vmem:[%s168 + $0x80] sm:$0xff]
        %v186 = vld [vmem:[%s168 + $0x88] sm:$0x3]
        %v187 = vld [vmem:[%s168 + $0x90] sm:$0xff]
        %v188 = vld [vmem:[%s168 + $0x98] sm:$0xff]
        %v189 = vld [vmem:[%s168 + $0xa0] sm:$0x3]
        %v190 = vld [vmem:[%s168 + $0xa8] sm:$0xff]
        %v191 = vld [vmem:[%s168 + $0xb0] sm:$0xff]
        %v192 = vld [vmem:[%s168 + $0xb8] sm:$0x3]
        %v193 = vld [vmem:[%s168 + $0xc0] sm:$0xff]
        %v194 = vld [vmem:[%s168 + $0xc8] sm:$0xff]
        %v195 = vld [vmem:[%s168 + $0xd0] sm:$0x3]
        %v196 = vld [vmem:[%s168 + $0xd8] sm:$0xff]
        %v197 = vld [vmem:[%s168 + $0xe0] sm:$0xff]
        %v198 = vld [vmem:[%s168 + $0xe8] sm:$0x3]
        %v199 = vld [vmem:[%s168 + $0xf0] sm:$0xff]
        %v200 = vld [vmem:[%s168 + $0xf8] sm:$0xff]
        %v201 = vld [vmem:[%s168 + $0x100] sm:$0x3]
        %v202 = vld [vmem:[%s168 + $0x108] sm:$0xff]
        %v203 = vld [vmem:[%s168 + $0x110] sm:$0xff]
        %v204 = vld [vmem:[%s168 + $0x118] sm:$0x3]
        %v205 = vld [vmem:[%s168 + $0x120] sm:$0xff]
        %v206 = vld [vmem:[%s168 + $0x128] sm:$0xff]
        %v207 = vld [vmem:[%s168 + $0x130] sm:$0x3]
        %v208 = vld [vmem:[%s168 + $0x138] sm:$0xff]
        %v209 = vld [vmem:[%s168 + $0x140] sm:$0xff]
        %v210 = vld [vmem:[%s168 + $0x148] sm:$0x3]
        %v211 = vld [vmem:[%s168 + $0x150] sm:$0xff]
        %v212 = vld [vmem:[%s168 + $0x158] sm:$0xff]
        %v213 = vld [vmem:[%s168 + $0x160] sm:$0x3]
        %v214 = vld [vmem:[%s168 + $0x168] sm:$0xff]
        %v215 = vld [vmem:[%s168 + $0x170] sm:$0xff]
        %v216 = vld [vmem:[%s168 + $0x178] sm:$0x3]
        %v217 = vld [vmem:[%s168 + $0x180] sm:$0xff]
        %v218 = vld [vmem:[%s168 + $0x188] sm:$0xff]
        %v219 = vld [vmem:[%s168 + $0x190] sm:$0x3]
        %v220 = vld [vmem:[%s168 + $0x198] sm:$0xff]
        %v221 = vld [vmem:[%s168 + $0x1a0] sm:$0xff]
        %v222 = vld [vmem:[%s168 + $0x1a8] sm:$0x3]
        %vm271 = vcmask 1046528
        %v272 = vrot.slane %v169, 1
        %v273 = vrot.slane %v170, 1
        %v274 = vsel %vm271, %v272, %v273
        %v275 = vrot.slane %v171, 1
        %v276 = vsel %vm271, %v273, %v275
        %v277 = vrot.slane %v172, 1
        %v278 = vrot.slane %v173, 1
        %v279 = vsel %vm271, %v277, %v278
        %v280 = vrot.slane %v174, 1
        %v281 = vsel %vm271, %v278, %v280
        %v282 = vrot.slane %v175, 1
        %v283 = vrot.slane %v176, 1
        %v284 = vsel %vm271, %v282, %v283
        %v285 = vrot.slane %v177, 1
        %v286 = vsel %vm271, %v283, %v285
        %v287 = vrot.slane %v178, 1
        %v288 = vrot.slane %v179, 1
        %v289 = vsel %vm271, %v287, %v288
        %v290 = vrot.slane %v180, 1
        %v291 = vsel %vm271, %v288, %v290
        %v292 = vrot.slane %v181, 1
        %v293 = vrot.slane %v182, 1
        %v294 = vsel %vm271, %v292, %v293
        %v295 = vrot.slane %v183, 1
        %v296 = vsel %vm271, %v293, %v295
        %v297 = vrot.slane %v184, 1
        %v298 = vrot.slane %v185, 1
        %v299 = vsel %vm271, %v297, %v298
        %v300 = vrot.slane %v186, 1
        %v301 = vsel %vm271, %v298, %v300
        %v302 = vrot.slane %v187, 1
        %v303 = vrot.slane %v188, 1
        %v304 = vsel %vm271, %v302, %v303
        %v305 = vrot.slane %v189, 1
        %v306 = vsel %vm271, %v303, %v305
        %v307 = vrot.slane %v190, 1
        %v308 = vrot.slane %v191, 1
        %v309 = vsel %vm271, %v307, %v308
        %v310 = vrot.slane %v192, 1
        %v311 = vsel %vm271, %v308, %v310
        %v312 = vrot.slane %v193, 1
        %v313 = vrot.slane %v194, 1
        %v314 = vsel %vm271, %v312, %v313
        %v315 = vrot.slane %v195, 1
        %v316 = vsel %vm271, %v313, %v315
        %v317 = vrot.slane %v196, 1
        %v318 = vrot.slane %v197, 1
        %v319 = vsel %vm271, %v317, %v318
        %v320 = vrot.slane %v198, 1
        %v321 = vsel %vm271, %v318, %v320
        %v322 = vrot.slane %v199, 1
        %v323 = vrot.slane %v200, 1
        %v324 = vsel %vm271, %v322, %v323
        %v325 = vrot.slane %v201, 1
        %v326 = vsel %vm271, %v323, %v325
        %v327 = vrot.slane %v202, 1
        %v328 = vrot.slane %v203, 1
        %v329 = vsel %vm271, %v327, %v328
        %v330 = vrot.slane %v204, 1
        %v331 = vsel %vm271, %v328, %v330
        %v332 = vrot.slane %v205, 1
        %v333 = vrot.slane %v206, 1
        %v334 = vsel %vm271, %v332, %v333
        %v335 = vrot.slane %v207, 1
        %v336 = vsel %vm271, %v333, %v335
        %v337 = vrot.slane %v208, 1
        %v338 = vrot.slane %v209, 1
        %v339 = vsel %vm271, %v337, %v338
        %v340 = vrot.slane %v210, 1
        %v341 = vsel %vm271, %v338, %v340
        %v342 = vrot.slane %v211, 1
        %v343 = vrot.slane %v212, 1
        %v344 = vsel %vm271, %v342, %v343
        %v345 = vrot.slane %v213, 1
        %v346 = vsel %vm271, %v343, %v345
        %v347 = vrot.slane %v214, 1
        %v348 = vrot.slane %v215, 1
        %v349 = vsel %vm271, %v347, %v348
        %v350 = vrot.slane %v216, 1
        %v351 = vsel %vm271, %v348, %v350
        %352 = vrot.lane.b32.xlu0 %v274, 4
        %v353 = vpop.permute.xlu0 %352
        %354 = vrot.lane.b32.xlu0 %v276, 4
        %v355 = vpop.permute.xlu0 %354
        %356 = vrot.lane.b32.xlu0 %v279, 4
        %v357 = vpop.permute.xlu0 %356
        %358 = vrot.lane.b32.xlu0 %v281, 4
        %v359 = vpop.permute.xlu0 %358
        %360 = vrot.lane.b32.xlu0 %v284, 4
        %v361 = vpop.permute.xlu0 %360
        %362 = vrot.lane.b32.xlu0 %v286, 4
        %v363 = vpop.permute.xlu0 %362
        %364 = vrot.lane.b32.xlu0 %v289, 4
        %v365 = vpop.permute.xlu0 %364
        %366 = vrot.lane.b32.xlu0 %v291, 4
        %v367 = vpop.permute.xlu0 %366
        %368 = vrot.lane.b32.xlu0 %v294, 4
        %v369 = vpop.permute.xlu0 %368
        %370 = vrot.lane.b32.xlu0 %v296, 4
        %v371 = vpop.permute.xlu0 %370
        %372 = vrot.lane.b32.xlu0 %v299, 4
        %v373 = vpop.permute.xlu0 %372
        %374 = vrot.lane.b32.xlu0 %v301, 4
        %v375 = vpop.permute.xlu0 %374
        %376 = vrot.lane.b32.xlu0 %v304, 4
        %v377 = vpop.permute.xlu0 %376
        %378 = vrot.lane.b32.xlu0 %v306, 4
        %v379 = vpop.permute.xlu0 %378
        %380 = vrot.lane.b32.xlu0 %v309, 4
        %v381 = vpop.permute.xlu0 %380
        %382 = vrot.lane.b32.xlu0 %v311, 4
        %v383 = vpop.permute.xlu0 %382
        %384 = vrot.lane.b32.xlu0 %v314, 4
        %v385 = vpop.permute.xlu0 %384
        %386 = vrot.lane.b32.xlu0 %v316, 4
        %v387 = vpop.permute.xlu0 %386
        %388 = vrot.lane.b32.xlu0 %v319, 4
        %v389 = vpop.permute.xlu0 %388
        %390 = vrot.lane.b32.xlu0 %v321, 4
        %v391 = vpop.permute.xlu0 %390
        %392 = vrot.lane.b32.xlu0 %v324, 4
        %v393 = vpop.permute.xlu0 %392
        %394 = vrot.lane.b32.xlu0 %v326, 4
        %v395 = vpop.permute.xlu0 %394
        %396 = vrot.lane.b32.xlu0 %v329, 4
        %v397 = vpop.permute.xlu0 %396
        %398 = vrot.lane.b32.xlu0 %v331, 4
        %v399 = vpop.permute.xlu0 %398
        %400 = vrot.lane.b32.xlu0 %v334, 4
        %v401 = vpop.permute.xlu0 %400
        %402 = vrot.lane.b32.xlu0 %v336, 4
        %v403 = vpop.permute.xlu0 %402
        %404 = vrot.lane.b32.xlu0 %v339, 4
        %v405 = vpop.permute.xlu0 %404
        %406 = vrot.lane.b32.xlu0 %v341, 4
        %v407 = vpop.permute.xlu0 %406
        %408 = vrot.lane.b32.xlu0 %v344, 4
        %v409 = vpop.permute.xlu0 %408
        %410 = vrot.lane.b32.xlu0 %v346, 4
        %v411 = vpop.permute.xlu0 %410
        %412 = vrot.lane.b32.xlu0 %v349, 4
        %v413 = vpop.permute.xlu0 %412
        %414 = vrot.lane.b32.xlu0 %v351, 4
        %v415 = vpop.permute.xlu0 %414
        %vm448 = vcmask 1045504
        %v449 = vrot.slane %v169, 2
        %v450 = vrot.slane %v170, 2
        %v451 = vsel %vm448, %v449, %v450
        %v452 = vrot.slane %v171, 2
        %v453 = vsel %vm448, %v450, %v452
        %v454 = vrot.slane %v172, 2
        %v455 = vrot.slane %v173, 2
        %v456 = vsel %vm448, %v454, %v455
        %v457 = vrot.slane %v174, 2
        %v458 = vsel %vm448, %v455, %v457
        %v459 = vrot.slane %v175, 2
        %v460 = vrot.slane %v176, 2
        %v461 = vsel %vm448, %v459, %v460
        %v462 = vrot.slane %v177, 2
        %v463 = vsel %vm448, %v460, %v462
        %v464 = vrot.slane %v178, 2
        %v465 = vrot.slane %v179, 2
        %v466 = vsel %vm448, %v464, %v465
        %v467 = vrot.slane %v180, 2
        %v468 = vsel %vm448, %v465, %v467
        %v469 = vrot.slane %v181, 2
        %v470 = vrot.slane %v182, 2
        %v471 = vsel %vm448, %v469, %v470
        %v472 = vrot.slane %v183, 2
        %v473 = vsel %vm448, %v470, %v472
        %v474 = vrot.slane %v184, 2
        %v475 = vrot.slane %v185, 2
        %v476 = vsel %vm448, %v474, %v475
        %v477 = vrot.slane %v186, 2
        %v478 = vsel %vm448, %v475, %v477
        %v479 = vrot.slane %v187, 2
        %v480 = vrot.slane %v188, 2
        %v481 = vsel %vm448, %v479, %v480
        %v482 = vrot.slane %v189, 2
        %v483 = vsel %vm448, %v480, %v482
        %v484 = vrot.slane %v190, 2
        %v485 = vrot.slane %v191, 2
        %v486 = vsel %vm448, %v484, %v485
        %v487 = vrot.slane %v192, 2
        %v488 = vsel %vm448, %v485, %v487
        %v489 = vrot.slane %v193, 2
        %v490 = vrot.slane %v194, 2
        %v491 = vsel %vm448, %v489, %v490
        %v492 = vrot.slane %v195, 2
        %v493 = vsel %vm448, %v490, %v492
        %v494 = vrot.slane %v196, 2
        %v495 = vrot.slane %v197, 2
        %v496 = vsel %vm448, %v494, %v495
        %v497 = vrot.slane %v198, 2
        %v498 = vsel %vm448, %v495, %v497
        %v499 = vrot.slane %v199, 2
        %v500 = vrot.slane %v200, 2
        %v501 = vsel %vm448, %v499, %v500
        %v502 = vrot.slane %v201, 2
        %v503 = vsel %vm448, %v500, %v502
        %v504 = vrot.slane %v202, 2
        %v505 = vrot.slane %v203, 2
        %v506 = vsel %vm448, %v504, %v505
        %v507 = vrot.slane %v204, 2
        %v508 = vsel %vm448, %v505, %v507
        %v509 = vrot.slane %v205, 2
        %v510 = vrot.slane %v206, 2
        %v511 = vsel %vm448, %v509, %v510
        %v512 = vrot.slane %v207, 2
        %v513 = vsel %vm448, %v510, %v512
        %v514 = vrot.slane %v208, 2
        %v515 = vrot.slane %v209, 2
        %v516 = vsel %vm448, %v514, %v515
        %v517 = vrot.slane %v210, 2
        %v518 = vsel %vm448, %v515, %v517
        %v519 = vrot.slane %v211, 2
        %v520 = vrot.slane %v212, 2
        %v521 = vsel %vm448, %v519, %v520
        %v522 = vrot.slane %v213, 2
        %v523 = vsel %vm448, %v520, %v522
        %v524 = vrot.slane %v214, 2
        %v525 = vrot.slane %v215, 2
        %v526 = vsel %vm448, %v524, %v525
        %v527 = vrot.slane %v216, 2
        %v528 = vsel %vm448, %v525, %v527
        %529 = vrot.lane.b32.xlu0 %v451, 8
        %v530 = vpop.permute.xlu0 %529
        %531 = vrot.lane.b32.xlu0 %v453, 8
        %v532 = vpop.permute.xlu0 %531
        %533 = vrot.lane.b32.xlu0 %v456, 8
        %v534 = vpop.permute.xlu0 %533
        %535 = vrot.lane.b32.xlu0 %v458, 8
        %v536 = vpop.permute.xlu0 %535
        %537 = vrot.lane.b32.xlu0 %v461, 8
        %v538 = vpop.permute.xlu0 %537
        %539 = vrot.lane.b32.xlu0 %v463, 8
        %v540 = vpop.permute.xlu0 %539
        %541 = vrot.lane.b32.xlu0 %v466, 8
        %v542 = vpop.permute.xlu0 %541
        %543 = vrot.lane.b32.xlu0 %v468, 8
        %v544 = vpop.permute.xlu0 %543
        %545 = vrot.lane.b32.xlu0 %v471, 8
        %v546 = vpop.permute.xlu0 %545
        %547 = vrot.lane.b32.xlu0 %v473, 8
        %v548 = vpop.permute.xlu0 %547
        %549 = vrot.lane.b32.xlu0 %v476, 8
        %v550 = vpop.permute.xlu0 %549
        %551 = vrot.lane.b32.xlu0 %v478, 8
        %v552 = vpop.permute.xlu0 %551
        %553 = vrot.lane.b32.xlu0 %v481, 8
        %v554 = vpop.permute.xlu0 %553
        %555 = vrot.lane.b32.xlu0 %v483, 8
        %v556 = vpop.permute.xlu0 %555
        %557 = vrot.lane.b32.xlu0 %v486, 8
        %v558 = vpop.permute.xlu0 %557
        %559 = vrot.lane.b32.xlu0 %v488, 8
        %v560 = vpop.permute.xlu0 %559
        %561 = vrot.lane.b32.xlu0 %v491, 8
        %v562 = vpop.permute.xlu0 %561
        %563 = vrot.lane.b32.xlu0 %v493, 8
        %v564 = vpop.permute.xlu0 %563
        %565 = vrot.lane.b32.xlu0 %v496, 8
        %v566 = vpop.permute.xlu0 %565
        %567 = vrot.lane.b32.xlu0 %v498, 8
        %v568 = vpop.permute.xlu0 %567
        %569 = vrot.lane.b32.xlu0 %v501, 8
        %v570 = vpop.permute.xlu0 %569
        %571 = vrot.lane.b32.xlu0 %v503, 8
        %v572 = vpop.permute.xlu0 %571
        %573 = vrot.lane.b32.xlu0 %v506, 8
        %v574 = vpop.permute.xlu0 %573
        %575 = vrot.lane.b32.xlu0 %v508, 8
        %v576 = vpop.permute.xlu0 %575
        %577 = vrot.lane.b32.xlu0 %v511, 8
        %v578 = vpop.permute.xlu0 %577
        %579 = vrot.lane.b32.xlu0 %v513, 8
        %v580 = vpop.permute.xlu0 %579
        %581 = vrot.lane.b32.xlu0 %v516, 8
        %v582 = vpop.permute.xlu0 %581
        %583 = vrot.lane.b32.xlu0 %v518, 8
        %v584 = vpop.permute.xlu0 %583
        %585 = vrot.lane.b32.xlu0 %v521, 8
        %v586 = vpop.permute.xlu0 %585
        %587 = vrot.lane.b32.xlu0 %v523, 8
        %v588 = vpop.permute.xlu0 %587
        %589 = vrot.lane.b32.xlu0 %v526, 8
        %v590 = vpop.permute.xlu0 %589
        %591 = vrot.lane.b32.xlu0 %v528, 8
        %v592 = vpop.permute.xlu0 %591
        %627 = vrot.lane.b32.xlu0 %v172, 12
        %v628 = vpop.permute.xlu0 %627
        %629 = vrot.lane.b32.xlu0 %v173, 12
        %v630 = vpop.permute.xlu0 %629
        %631 = vrot.lane.b32.xlu0 %v175, 12
        %v632 = vpop.permute.xlu0 %631
        %633 = vrot.lane.b32.xlu0 %v176, 12
        %v634 = vpop.permute.xlu0 %633
        %635 = vrot.lane.b32.xlu0 %v178, 12
        %v636 = vpop.permute.xlu0 %635
        %637 = vrot.lane.b32.xlu0 %v179, 12
        %v638 = vpop.permute.xlu0 %637
        %639 = vrot.lane.b32.xlu0 %v181, 12
        %v640 = vpop.permute.xlu0 %639
        %641 = vrot.lane.b32.xlu0 %v182, 12
        %v642 = vpop.permute.xlu0 %641
        %643 = vrot.lane.b32.xlu0 %v184, 12
        %v644 = vpop.permute.xlu0 %643
        %645 = vrot.lane.b32.xlu0 %v185, 12
        %v646 = vpop.permute.xlu0 %645
        %647 = vrot.lane.b32.xlu0 %v187, 12
        %v648 = vpop.permute.xlu0 %647
        %649 = vrot.lane.b32.xlu0 %v188, 12
        %v650 = vpop.permute.xlu0 %649
        %651 = vrot.lane.b32.xlu0 %v190, 12
        %v652 = vpop.permute.xlu0 %651
        %653 = vrot.lane.b32.xlu0 %v191, 12
        %v654 = vpop.permute.xlu0 %653
        %655 = vrot.lane.b32.xlu0 %v193, 12
        %v656 = vpop.permute.xlu0 %655
        %657 = vrot.lane.b32.xlu0 %v194, 12
        %v658 = vpop.permute.xlu0 %657
        %659 = vrot.lane.b32.xlu0 %v196, 12
        %v660 = vpop.permute.xlu0 %659
        %661 = vrot.lane.b32.xlu0 %v197, 12
        %v662 = vpop.permute.xlu0 %661
        %663 = vrot.lane.b32.xlu0 %v199, 12
        %v664 = vpop.permute.xlu0 %663
        %665 = vrot.lane.b32.xlu0 %v200, 12
        %v666 = vpop.permute.xlu0 %665
        %667 = vrot.lane.b32.xlu0 %v202, 12
        %v668 = vpop.permute.xlu0 %667
        %669 = vrot.lane.b32.xlu0 %v203, 12
        %v670 = vpop.permute.xlu0 %669
        %671 = vrot.lane.b32.xlu0 %v205, 12
        %v672 = vpop.permute.xlu0 %671
        %673 = vrot.lane.b32.xlu0 %v206, 12
        %v674 = vpop.permute.xlu0 %673
        %675 = vrot.lane.b32.xlu0 %v208, 12
        %v676 = vpop.permute.xlu0 %675
        %677 = vrot.lane.b32.xlu0 %v209, 12
        %v678 = vpop.permute.xlu0 %677
        %679 = vrot.lane.b32.xlu0 %v211, 12
        %v680 = vpop.permute.xlu0 %679
        %681 = vrot.lane.b32.xlu0 %v212, 12
        %v682 = vpop.permute.xlu0 %681
        %683 = vrot.lane.b32.xlu0 %v214, 12
        %v684 = vpop.permute.xlu0 %683
        %685 = vrot.lane.b32.xlu0 %v215, 12
        %v686 = vpop.permute.xlu0 %685
        %687 = vrot.lane.b32.xlu0 %v217, 12
        %v688 = vpop.permute.xlu0 %687
        %689 = vrot.lane.b32.xlu0 %v218, 12
        %v690 = vpop.permute.xlu0 %689
        %v724 = vrot.slane %v217, 1
        %v725 = vrot.slane %v218, 1
        %v726 = vsel %vm271, %v724, %v725
        %v727 = vrot.slane %v219, 1
        %v728 = vsel %vm271, %v725, %v727
        %729 = vrot.lane.b32.xlu0 %v279, 16
        %v730 = vpop.permute.xlu0 %729
        %731 = vrot.lane.b32.xlu0 %v281, 16
        %v732 = vpop.permute.xlu0 %731
        %733 = vrot.lane.b32.xlu0 %v284, 16
        %v734 = vpop.permute.xlu0 %733
        %735 = vrot.lane.b32.xlu0 %v286, 16
        %v736 = vpop.permute.xlu0 %735
        %737 = vrot.lane.b32.xlu0 %v289, 16
        %v738 = vpop.permute.xlu0 %737
        %739 = vrot.lane.b32.xlu0 %v291, 16
        %v740 = vpop.permute.xlu0 %739
        %741 = vrot.lane.b32.xlu0 %v294, 16
        %v742 = vpop.permute.xlu0 %741
        %743 = vrot.lane.b32.xlu0 %v296, 16
        %v744 = vpop.permute.xlu0 %743
        %745 = vrot.lane.b32.xlu0 %v299, 16
        %v746 = vpop.permute.xlu0 %745
        %747 = vrot.lane.b32.xlu0 %v301, 16
        %v748 = vpop.permute.xlu0 %747
        %749 = vrot.lane.b32.xlu0 %v304, 16
        %v750 = vpop.permute.xlu0 %749
        %751 = vrot.lane.b32.xlu0 %v306, 16
        %v752 = vpop.permute.xlu0 %751
        %753 = vrot.lane.b32.xlu0 %v309, 16
        %v754 = vpop.permute.xlu0 %753
        %755 = vrot.lane.b32.xlu0 %v311, 16
        %v756 = vpop.permute.xlu0 %755
        %757 = vrot.lane.b32.xlu0 %v314, 16
        %v758 = vpop.permute.xlu0 %757
        %759 = vrot.lane.b32.xlu0 %v316, 16
        %v760 = vpop.permute.xlu0 %759
        %761 = vrot.lane.b32.xlu0 %v319, 16
        %v762 = vpop.permute.xlu0 %761
        %763 = vrot.lane.b32.xlu0 %v321, 16
        %v764 = vpop.permute.xlu0 %763
        %765 = vrot.lane.b32.xlu0 %v324, 16
        %v766 = vpop.permute.xlu0 %765
        %767 = vrot.lane.b32.xlu0 %v326, 16
        %v768 = vpop.permute.xlu0 %767
        %769 = vrot.lane.b32.xlu0 %v329, 16
        %v770 = vpop.permute.xlu0 %769
        %771 = vrot.lane.b32.xlu0 %v331, 16
        %v772 = vpop.permute.xlu0 %771
        %773 = vrot.lane.b32.xlu0 %v334, 16
        %v774 = vpop.permute.xlu0 %773
        %775 = vrot.lane.b32.xlu0 %v336, 16
        %v776 = vpop.permute.xlu0 %775
        %777 = vrot.lane.b32.xlu0 %v339, 16
        %v778 = vpop.permute.xlu0 %777
        %779 = vrot.lane.b32.xlu0 %v341, 16
        %v780 = vpop.permute.xlu0 %779
        %781 = vrot.lane.b32.xlu0 %v344, 16
        %v782 = vpop.permute.xlu0 %781
        %783 = vrot.lane.b32.xlu0 %v346, 16
        %v784 = vpop.permute.xlu0 %783
        %785 = vrot.lane.b32.xlu0 %v349, 16
        %v786 = vpop.permute.xlu0 %785
        %787 = vrot.lane.b32.xlu0 %v351, 16
        %v788 = vpop.permute.xlu0 %787
        %789 = vrot.lane.b32.xlu0 %v726, 16
        %v790 = vpop.permute.xlu0 %789
        %791 = vrot.lane.b32.xlu0 %v728, 16
        %v792 = vpop.permute.xlu0 %791
        %v825 = vrot.slane %v217, 2
        %v826 = vrot.slane %v218, 2
        %v827 = vsel %vm448, %v825, %v826
        %v828 = vrot.slane %v219, 2
        %v829 = vsel %vm448, %v826, %v828
        %830 = vrot.lane.b32.xlu0 %v456, 20
        %v831 = vpop.permute.xlu0 %830
        %832 = vrot.lane.b32.xlu0 %v458, 20
        %v833 = vpop.permute.xlu0 %832
        %834 = vrot.lane.b32.xlu0 %v461, 20
        %v835 = vpop.permute.xlu0 %834
        %836 = vrot.lane.b32.xlu0 %v463, 20
        %v837 = vpop.permute.xlu0 %836
        %838 = vrot.lane.b32.xlu0 %v466, 20
        %v839 = vpop.permute.xlu0 %838
        %840 = vrot.lane.b32.xlu0 %v468, 20
        %v841 = vpop.permute.xlu0 %840
        %842 = vrot.lane.b32.xlu0 %v471, 20
        %v843 = vpop.permute.xlu0 %842
        %844 = vrot.lane.b32.xlu0 %v473, 20
        %v845 = vpop.permute.xlu0 %844
        %846 = vrot.lane.b32.xlu0 %v476, 20
        %v847 = vpop.permute.xlu0 %846
        %848 = vrot.lane.b32.xlu0 %v478, 20
        %v849 = vpop.permute.xlu0 %848
        %850 = vrot.lane.b32.xlu0 %v481, 20
        %v851 = vpop.permute.xlu0 %850
        %852 = vrot.lane.b32.xlu0 %v483, 20
        %v853 = vpop.permute.xlu0 %852
        %854 = vrot.lane.b32.xlu0 %v486, 20
        %v855 = vpop.permute.xlu0 %854
        %856 = vrot.lane.b32.xlu0 %v488, 20
        %v857 = vpop.permute.xlu0 %856
        %858 = vrot.lane.b32.xlu0 %v491, 20
        %v859 = vpop.permute.xlu0 %858
        %860 = vrot.lane.b32.xlu0 %v493, 20
        %v861 = vpop.permute.xlu0 %860
        %862 = vrot.lane.b32.xlu0 %v496, 20
        %v863 = vpop.permute.xlu0 %862
        %864 = vrot.lane.b32.xlu0 %v498, 20
        %v865 = vpop.permute.xlu0 %864
        %866 = vrot.lane.b32.xlu0 %v501, 20
        %v867 = vpop.permute.xlu0 %866
        %868 = vrot.lane.b32.xlu0 %v503, 20
        %v869 = vpop.permute.xlu0 %868
        %870 = vrot.lane.b32.xlu0 %v506, 20
        %v871 = vpop.permute.xlu0 %870
        %872 = vrot.lane.b32.xlu0 %v508, 20
        %v873 = vpop.permute.xlu0 %872
        %874 = vrot.lane.b32.xlu0 %v511, 20
        %v875 = vpop.permute.xlu0 %874
        %876 = vrot.lane.b32.xlu0 %v513, 20
        %v877 = vpop.permute.xlu0 %876
        %878 = vrot.lane.b32.xlu0 %v516, 20
        %v879 = vpop.permute.xlu0 %878
        %880 = vrot.lane.b32.xlu0 %v518, 20
        %v881 = vpop.permute.xlu0 %880
        %882 = vrot.lane.b32.xlu0 %v521, 20
        %v883 = vpop.permute.xlu0 %882
        %884 = vrot.lane.b32.xlu0 %v523, 20
        %v885 = vpop.permute.xlu0 %884
        %886 = vrot.lane.b32.xlu0 %v526, 20
        %v887 = vpop.permute.xlu0 %886
        %888 = vrot.lane.b32.xlu0 %v528, 20
        %v889 = vpop.permute.xlu0 %888
        %890 = vrot.lane.b32.xlu0 %v827, 20
        %v891 = vpop.permute.xlu0 %890
        %892 = vrot.lane.b32.xlu0 %v829, 20
        %v893 = vpop.permute.xlu0 %892
        %928 = vrot.lane.b32.xlu0 %v175, 24
        %v929 = vpop.permute.xlu0 %928
        %930 = vrot.lane.b32.xlu0 %v176, 24
        %v931 = vpop.permute.xlu0 %930
        %932 = vrot.lane.b32.xlu0 %v178, 24
        %v933 = vpop.permute.xlu0 %932
        %934 = vrot.lane.b32.xlu0 %v179, 24
        %v935 = vpop.permute.xlu0 %934
        %936 = vrot.lane.b32.xlu0 %v181, 24
        %v937 = vpop.permute.xlu0 %936
        %938 = vrot.lane.b32.xlu0 %v182, 24
        %v939 = vpop.permute.xlu0 %938
        %940 = vrot.lane.b32.xlu0 %v184, 24
        %v941 = vpop.permute.xlu0 %940
        %942 = vrot.lane.b32.xlu0 %v185, 24
        %v943 = vpop.permute.xlu0 %942
        %944 = vrot.lane.b32.xlu0 %v187, 24
        %v945 = vpop.permute.xlu0 %944
        %946 = vrot.lane.b32.xlu0 %v188, 24
        %v947 = vpop.permute.xlu0 %946
        %948 = vrot.lane.b32.xlu0 %v190, 24
        %v949 = vpop.permute.xlu0 %948
        %950 = vrot.lane.b32.xlu0 %v191, 24
        %v951 = vpop.permute.xlu0 %950
        %952 = vrot.lane.b32.xlu0 %v193, 24
        %v953 = vpop.permute.xlu0 %952
        %954 = vrot.lane.b32.xlu0 %v194, 24
        %v955 = vpop.permute.xlu0 %954
        %956 = vrot.lane.b32.xlu0 %v196, 24
        %v957 = vpop.permute.xlu0 %956
        %958 = vrot.lane.b32.xlu0 %v197, 24
        %v959 = vpop.permute.xlu0 %958
        %960 = vrot.lane.b32.xlu0 %v199, 24
        %v961 = vpop.permute.xlu0 %960
        %962 = vrot.lane.b32.xlu0 %v200, 24
        %v963 = vpop.permute.xlu0 %962
        %964 = vrot.lane.b32.xlu0 %v202, 24
        %v965 = vpop.permute.xlu0 %964
        %966 = vrot.lane.b32.xlu0 %v203, 24
        %v967 = vpop.permute.xlu0 %966
        %968 = vrot.lane.b32.xlu0 %v205, 24
        %v969 = vpop.permute.xlu0 %968
        %970 = vrot.lane.b32.xlu0 %v206, 24
        %v971 = vpop.permute.xlu0 %970
        %972 = vrot.lane.b32.xlu0 %v208, 24
        %v973 = vpop.permute.xlu0 %972
        %974 = vrot.lane.b32.xlu0 %v209, 24
        %v975 = vpop.permute.xlu0 %974
        %976 = vrot.lane.b32.xlu0 %v211, 24
        %v977 = vpop.permute.xlu0 %976
        %978 = vrot.lane.b32.xlu0 %v212, 24
        %v979 = vpop.permute.xlu0 %978
        %980 = vrot.lane.b32.xlu0 %v214, 24
        %v981 = vpop.permute.xlu0 %980
        %982 = vrot.lane.b32.xlu0 %v215, 24
        %v983 = vpop.permute.xlu0 %982
        %984 = vrot.lane.b32.xlu0 %v217, 24
        %v985 = vpop.permute.xlu0 %984
        %986 = vrot.lane.b32.xlu0 %v218, 24
        %v987 = vpop.permute.xlu0 %986
        %988 = vrot.lane.b32.xlu0 %v220, 24
        %v989 = vpop.permute.xlu0 %988
        %990 = vrot.lane.b32.xlu0 %v221, 24
        %v991 = vpop.permute.xlu0 %990
        %v1025 = vrot.slane %v220, 1
        %v1026 = vrot.slane %v221, 1
        %v1027 = vsel %vm271, %v1025, %v1026
        %v1028 = vrot.slane %v222, 1
        %v1029 = vsel %vm271, %v1026, %v1028
        %1030 = vrot.lane.b32.xlu0 %v284, 28
        %v1031 = vpop.permute.xlu0 %1030
        %1032 = vrot.lane.b32.xlu0 %v286, 28
        %v1033 = vpop.permute.xlu0 %1032
        %1034 = vrot.lane.b32.xlu0 %v289, 28
        %v1035 = vpop.permute.xlu0 %1034
        %1036 = vrot.lane.b32.xlu0 %v291, 28
        %v1037 = vpop.permute.xlu0 %1036
        %1038 = vrot.lane.b32.xlu0 %v294, 28
        %v1039 = vpop.permute.xlu0 %1038
        %1040 = vrot.lane.b32.xlu0 %v296, 28
        %v1041 = vpop.permute.xlu0 %1040
        %1042 = vrot.lane.b32.xlu0 %v299, 28
        %v1043 = vpop.permute.xlu0 %1042
        %1044 = vrot.lane.b32.xlu0 %v301, 28
        %v1045 = vpop.permute.xlu0 %1044
        %1046 = vrot.lane.b32.xlu0 %v304, 28
        %v1047 = vpop.permute.xlu0 %1046
        %1048 = vrot.lane.b32.xlu0 %v306, 28
        %v1049 = vpop.permute.xlu0 %1048
        %1050 = vrot.lane.b32.xlu0 %v309, 28
        %v1051 = vpop.permute.xlu0 %1050
        %1052 = vrot.lane.b32.xlu0 %v311, 28
        %v1053 = vpop.permute.xlu0 %1052
        %1054 = vrot.lane.b32.xlu0 %v314, 28
        %v1055 = vpop.permute.xlu0 %1054
        %1056 = vrot.lane.b32.xlu0 %v316, 28
        %v1057 = vpop.permute.xlu0 %1056
        %1058 = vrot.lane.b32.xlu0 %v319, 28
        %v1059 = vpop.permute.xlu0 %1058
        %1060 = vrot.lane.b32.xlu0 %v321, 28
        %v1061 = vpop.permute.xlu0 %1060
        %1062 = vrot.lane.b32.xlu0 %v324, 28
        %v1063 = vpop.permute.xlu0 %1062
        %1064 = vrot.lane.b32.xlu0 %v326, 28
        %v1065 = vpop.permute.xlu0 %1064
        %1066 = vrot.lane.b32.xlu0 %v329, 28
        %v1067 = vpop.permute.xlu0 %1066
        %1068 = vrot.lane.b32.xlu0 %v331, 28
        %v1069 = vpop.permute.xlu0 %1068
        %1070 = vrot.lane.b32.xlu0 %v334, 28
        %v1071 = vpop.permute.xlu0 %1070
        %1072 = vrot.lane.b32.xlu0 %v336, 28
        %v1073 = vpop.permute.xlu0 %1072
        %1074 = vrot.lane.b32.xlu0 %v339, 28
        %v1075 = vpop.permute.xlu0 %1074
        %1076 = vrot.lane.b32.xlu0 %v341, 28
        %v1077 = vpop.permute.xlu0 %1076
        %1078 = vrot.lane.b32.xlu0 %v344, 28
        %v1079 = vpop.permute.xlu0 %1078
        %1080 = vrot.lane.b32.xlu0 %v346, 28
        %v1081 = vpop.permute.xlu0 %1080
        %1082 = vrot.lane.b32.xlu0 %v349, 28
        %v1083 = vpop.permute.xlu0 %1082
        %1084 = vrot.lane.b32.xlu0 %v351, 28
        %v1085 = vpop.permute.xlu0 %1084
        %1086 = vrot.lane.b32.xlu0 %v726, 28
        %v1087 = vpop.permute.xlu0 %1086
        %1088 = vrot.lane.b32.xlu0 %v728, 28
        %v1089 = vpop.permute.xlu0 %1088
        %1090 = vrot.lane.b32.xlu0 %v1027, 28
        %v1091 = vpop.permute.xlu0 %1090
        %1092 = vrot.lane.b32.xlu0 %v1029, 28
        %v1093 = vpop.permute.xlu0 %1092
        %v1126 = vrot.slane %v220, 2
        %v1127 = vrot.slane %v221, 2
        %v1128 = vsel %vm448, %v1126, %v1127
        %v1129 = vrot.slane %v222, 2
        %v1130 = vsel %vm448, %v1127, %v1129
        %1131 = vrot.lane.b32.xlu0 %v461, 32
        %v1132 = vpop.permute.xlu0 %1131
        %1133 = vrot.lane.b32.xlu0 %v463, 32
        %v1134 = vpop.permute.xlu0 %1133
        %1135 = vrot.lane.b32.xlu0 %v466, 32
        %v1136 = vpop.permute.xlu0 %1135
        %1137 = vrot.lane.b32.xlu0 %v468, 32
        %v1138 = vpop.permute.xlu0 %1137
        %1139 = vrot.lane.b32.xlu0 %v471, 32
        %v1140 = vpop.permute.xlu0 %1139
        %1141 = vrot.lane.b32.xlu0 %v473, 32
        %v1142 = vpop.permute.xlu0 %1141
        %1143 = vrot.lane.b32.xlu0 %v476, 32
        %v1144 = vpop.permute.xlu0 %1143
        %1145 = vrot.lane.b32.xlu0 %v478, 32
        %v1146 = vpop.permute.xlu0 %1145
        %1147 = vrot.lane.b32.xlu0 %v481, 32
        %v1148 = vpop.permute.xlu0 %1147
        %1149 = vrot.lane.b32.xlu0 %v483, 32
        %v1150 = vpop.permute.xlu0 %1149
        %1151 = vrot.lane.b32.xlu0 %v486, 32
        %v1152 = vpop.permute.xlu0 %1151
        %1153 = vrot.lane.b32.xlu0 %v488, 32
        %v1154 = vpop.permute.xlu0 %1153
        %1155 = vrot.lane.b32.xlu0 %v491, 32
        %v1156 = vpop.permute.xlu0 %1155
        %1157 = vrot.lane.b32.xlu0 %v493, 32
        %v1158 = vpop.permute.xlu0 %1157
        %1159 = vrot.lane.b32.xlu0 %v496, 32
        %v1160 = vpop.permute.xlu0 %1159
        %1161 = vrot.lane.b32.xlu0 %v498, 32
        %v1162 = vpop.permute.xlu0 %1161
        %1163 = vrot.lane.b32.xlu0 %v501, 32
        %v1164 = vpop.permute.xlu0 %1163
        %1165 = vrot.lane.b32.xlu0 %v503, 32
        %v1166 = vpop.permute.xlu0 %1165
        %1167 = vrot.lane.b32.xlu0 %v506, 32
        %v1168 = vpop.permute.xlu0 %1167
        %1169 = vrot.lane.b32.xlu0 %v508, 32
        %v1170 = vpop.permute.xlu0 %1169
        %1171 = vrot.lane.b32.xlu0 %v511, 32
        %v1172 = vpop.permute.xlu0 %1171
        %1173 = vrot.lane.b32.xlu0 %v513, 32
        %v1174 = vpop.permute.xlu0 %1173
        %1175 = vrot.lane.b32.xlu0 %v516, 32
        %v1176 = vpop.permute.xlu0 %1175
        %1177 = vrot.lane.b32.xlu0 %v518, 32
        %v1178 = vpop.permute.xlu0 %1177
        %1179 = vrot.lane.b32.xlu0 %v521, 32
        %v1180 = vpop.permute.xlu0 %1179
        %1181 = vrot.lane.b32.xlu0 %v523, 32
        %v1182 = vpop.permute.xlu0 %1181
        %1183 = vrot.lane.b32.xlu0 %v526, 32
        %v1184 = vpop.permute.xlu0 %1183
        %1185 = vrot.lane.b32.xlu0 %v528, 32
        %v1186 = vpop.permute.xlu0 %1185
        %1187 = vrot.lane.b32.xlu0 %v827, 32
        %v1188 = vpop.permute.xlu0 %1187
        %1189 = vrot.lane.b32.xlu0 %v829, 32
        %v1190 = vpop.permute.xlu0 %1189
        %1191 = vrot.lane.b32.xlu0 %v1128, 32
        %v1192 = vpop.permute.xlu0 %1191
        %1193 = vrot.lane.b32.xlu0 %v1130, 32
        %v1194 = vpop.permute.xlu0 %1193
        %vm1227 = vcmask 31744
        %v1228 = vsel %vm1227, %v169, %v353
        %v1229 = vsel %vm1227, %v170, %v355
        %v1230 = vsel %vm1227, %v172, %v357
        %v1231 = vsel %vm1227, %v173, %v359
        %v1232 = vsel %vm1227, %v175, %v361
        %v1233 = vsel %vm1227, %v176, %v363
        %v1234 = vsel %vm1227, %v178, %v365
        %v1235 = vsel %vm1227, %v179, %v367
        %v1236 = vsel %vm1227, %v181, %v369
        %v1237 = vsel %vm1227, %v182, %v371
        %v1238 = vsel %vm1227, %v184, %v373
        %v1239 = vsel %vm1227, %v185, %v375
        %v1240 = vsel %vm1227, %v187, %v377
        %v1241 = vsel %vm1227, %v188, %v379
        %v1242 = vsel %vm1227, %v190, %v381
        %v1243 = vsel %vm1227, %v191, %v383
        %v1244 = vsel %vm1227, %v193, %v385
        %v1245 = vsel %vm1227, %v194, %v387
        %v1246 = vsel %vm1227, %v196, %v389
        %v1247 = vsel %vm1227, %v197, %v391
        %v1248 = vsel %vm1227, %v199, %v393
        %v1249 = vsel %vm1227, %v200, %v395
        %v1250 = vsel %vm1227, %v202, %v397
        %v1251 = vsel %vm1227, %v203, %v399
        %v1252 = vsel %vm1227, %v205, %v401
        %v1253 = vsel %vm1227, %v206, %v403
        %v1254 = vsel %vm1227, %v208, %v405
        %v1255 = vsel %vm1227, %v209, %v407
        %v1256 = vsel %vm1227, %v211, %v409
        %v1257 = vsel %vm1227, %v212, %v411
        %v1258 = vsel %vm1227, %v214, %v413
        %v1259 = vsel %vm1227, %v215, %v415
        %vm1260 = vcmask 64512
        %v1261 = vsel %vm1260, %v1228, %v530
        %v1262 = vsel %vm1260, %v1229, %v532
        %v1263 = vsel %vm1260, %v1230, %v534
        %v1264 = vsel %vm1260, %v1231, %v536
        %v1265 = vsel %vm1260, %v1232, %v538
        %v1266 = vsel %vm1260, %v1233, %v540
        %v1267 = vsel %vm1260, %v1234, %v542
        %v1268 = vsel %vm1260, %v1235, %v544
        %v1269 = vsel %vm1260, %v1236, %v546
        %v1270 = vsel %vm1260, %v1237, %v548
        %v1271 = vsel %vm1260, %v1238, %v550
        %v1272 = vsel %vm1260, %v1239, %v552
        %v1273 = vsel %vm1260, %v1240, %v554
        %v1274 = vsel %vm1260, %v1241, %v556
        %v1275 = vsel %vm1260, %v1242, %v558
        %v1276 = vsel %vm1260, %v1243, %v560
        %v1277 = vsel %vm1260, %v1244, %v562
        %v1278 = vsel %vm1260, %v1245, %v564
        %v1279 = vsel %vm1260, %v1246, %v566
        %v1280 = vsel %vm1260, %v1247, %v568
        %v1281 = vsel %vm1260, %v1248, %v570
        %v1282 = vsel %vm1260, %v1249, %v572
        %v1283 = vsel %vm1260, %v1250, %v574
        %v1284 = vsel %vm1260, %v1251, %v576
        %v1285 = vsel %vm1260, %v1252, %v578
        %v1286 = vsel %vm1260, %v1253, %v580
        %v1287 = vsel %vm1260, %v1254, %v582
        %v1288 = vsel %vm1260, %v1255, %v584
        %v1289 = vsel %vm1260, %v1256, %v586
        %v1290 = vsel %vm1260, %v1257, %v588
        %v1291 = vsel %vm1260, %v1258, %v590
        %v1292 = vsel %vm1260, %v1259, %v592
        %vm1293 = vcmask 97280
        %v1294 = vsel %vm1293, %v1261, %v628
        %v1295 = vsel %vm1293, %v1262, %v630
        %v1296 = vsel %vm1293, %v1263, %v632
        %v1297 = vsel %vm1293, %v1264, %v634
        %v1298 = vsel %vm1293, %v1265, %v636
        %v1299 = vsel %vm1293, %v1266, %v638
        %v1300 = vsel %vm1293, %v1267, %v640
        %v1301 = vsel %vm1293, %v1268, %v642
        %v1302 = vsel %vm1293, %v1269, %v644
        %v1303 = vsel %vm1293, %v1270, %v646
        %v1304 = vsel %vm1293, %v1271, %v648
        %v1305 = vsel %vm1293, %v1272, %v650
        %v1306 = vsel %vm1293, %v1273, %v652
        %v1307 = vsel %vm1293, %v1274, %v654
        %v1308 = vsel %vm1293, %v1275, %v656
        %v1309 = vsel %vm1293, %v1276, %v658
        %v1310 = vsel %vm1293, %v1277, %v660
        %v1311 = vsel %vm1293, %v1278, %v662
        %v1312 = vsel %vm1293, %v1279, %v664
        %v1313 = vsel %vm1293, %v1280, %v666
        %v1314 = vsel %vm1293, %v1281, %v668
        %v1315 = vsel %vm1293, %v1282, %v670
        %v1316 = vsel %vm1293, %v1283, %v672
        %v1317 = vsel %vm1293, %v1284, %v674
        %v1318 = vsel %vm1293, %v1285, %v676
        %v1319 = vsel %vm1293, %v1286, %v678
        %v1320 = vsel %vm1293, %v1287, %v680
        %v1321 = vsel %vm1293, %v1288, %v682
        %v1322 = vsel %vm1293, %v1289, %v684
        %v1323 = vsel %vm1293, %v1290, %v686
        %v1324 = vsel %vm1293, %v1291, %v688
        %v1325 = vsel %vm1293, %v1292, %v690
        %vm1326 = vcmask 130048
        %v1327 = vsel %vm1326, %v1294, %v730
        %v1328 = vsel %vm1326, %v1295, %v732
        %v1329 = vsel %vm1326, %v1296, %v734
        %v1330 = vsel %vm1326, %v1297, %v736
        %v1331 = vsel %vm1326, %v1298, %v738
        %v1332 = vsel %vm1326, %v1299, %v740
        %v1333 = vsel %vm1326, %v1300, %v742
        %v1334 = vsel %vm1326, %v1301, %v744
        %v1335 = vsel %vm1326, %v1302, %v746
        %v1336 = vsel %vm1326, %v1303, %v748
        %v1337 = vsel %vm1326, %v1304, %v750
        %v1338 = vsel %vm1326, %v1305, %v752
        %v1339 = vsel %vm1326, %v1306, %v754
        %v1340 = vsel %vm1326, %v1307, %v756
        %v1341 = vsel %vm1326, %v1308, %v758
        %v1342 = vsel %vm1326, %v1309, %v760
        %v1343 = vsel %vm1326, %v1310, %v762
        %v1344 = vsel %vm1326, %v1311, %v764
        %v1345 = vsel %vm1326, %v1312, %v766
        %v1346 = vsel %vm1326, %v1313, %v768
        %v1347 = vsel %vm1326, %v1314, %v770
        %v1348 = vsel %vm1326, %v1315, %v772
        %v1349 = vsel %vm1326, %v1316, %v774
        %v1350 = vsel %vm1326, %v1317, %v776
        %v1351 = vsel %vm1326, %v1318, %v778
        %v1352 = vsel %vm1326, %v1319, %v780
        %v1353 = vsel %vm1326, %v1320, %v782
        %v1354 = vsel %vm1326, %v1321, %v784
        %v1355 = vsel %vm1326, %v1322, %v786
        %v1356 = vsel %vm1326, %v1323, %v788
        %v1357 = vsel %vm1326, %v1324, %v790
        %v1358 = vsel %vm1326, %v1325, %v792
        %vm1359 = vcmask 162816
        %v1360 = vsel %vm1359, %v1327, %v831
        %v1361 = vsel %vm1359, %v1328, %v833
        %v1362 = vsel %vm1359, %v1329, %v835
        %v1363 = vsel %vm1359, %v1330, %v837
        %v1364 = vsel %vm1359, %v1331, %v839
        %v1365 = vsel %vm1359, %v1332, %v841
        %v1366 = vsel %vm1359, %v1333, %v843
        %v1367 = vsel %vm1359, %v1334, %v845
        %v1368 = vsel %vm1359, %v1335, %v847
        %v1369 = vsel %vm1359, %v1336, %v849
        %v1370 = vsel %vm1359, %v1337, %v851
        %v1371 = vsel %vm1359, %v1338, %v853
        %v1372 = vsel %vm1359, %v1339, %v855
        %v1373 = vsel %vm1359, %v1340, %v857
        %v1374 = vsel %vm1359, %v1341, %v859
        %v1375 = vsel %vm1359, %v1342, %v861
        %v1376 = vsel %vm1359, %v1343, %v863
        %v1377 = vsel %vm1359, %v1344, %v865
        %v1378 = vsel %vm1359, %v1345, %v867
        %v1379 = vsel %vm1359, %v1346, %v869
        %v1380 = vsel %vm1359, %v1347, %v871
        %v1381 = vsel %vm1359, %v1348, %v873
        %v1382 = vsel %vm1359, %v1349, %v875
        %v1383 = vsel %vm1359, %v1350, %v877
        %v1384 = vsel %vm1359, %v1351, %v879
        %v1385 = vsel %vm1359, %v1352, %v881
        %v1386 = vsel %vm1359, %v1353, %v883
        %v1387 = vsel %vm1359, %v1354, %v885
        %v1388 = vsel %vm1359, %v1355, %v887
        %v1389 = vsel %vm1359, %v1356, %v889
        %v1390 = vsel %vm1359, %v1357, %v891
        %v1391 = vsel %vm1359, %v1358, %v893
        %vm1392 = vcmask 195584
        %v1393 = vsel %vm1392, %v1360, %v929
        %v1394 = vsel %vm1392, %v1361, %v931
        %v1395 = vsel %vm1392, %v1362, %v933
        %v1396 = vsel %vm1392, %v1363, %v935
        %v1397 = vsel %vm1392, %v1364, %v937
        %v1398 = vsel %vm1392, %v1365, %v939
        %v1399 = vsel %vm1392, %v1366, %v941
        %v1400 = vsel %vm1392, %v1367, %v943
        %v1401 = vsel %vm1392, %v1368, %v945
        %v1402 = vsel %vm1392, %v1369, %v947
        %v1403 = vsel %vm1392, %v1370, %v949
        %v1404 = vsel %vm1392, %v1371, %v951
        %v1405 = vsel %vm1392, %v1372, %v953
        %v1406 = vsel %vm1392, %v1373, %v955
        %v1407 = vsel %vm1392, %v1374, %v957
        %v1408 = vsel %vm1392, %v1375, %v959
        %v1409 = vsel %vm1392, %v1376, %v961
        %v1410 = vsel %vm1392, %v1377, %v963
        %v1411 = vsel %vm1392, %v1378, %v965
        %v1412 = vsel %vm1392, %v1379, %v967
        %v1413 = vsel %vm1392, %v1380, %v969
        %v1414 = vsel %vm1392, %v1381, %v971
        %v1415 = vsel %vm1392, %v1382, %v973
        %v1416 = vsel %vm1392, %v1383, %v975
        %v1417 = vsel %vm1392, %v1384, %v977
        %v1418 = vsel %vm1392, %v1385, %v979
        %v1419 = vsel %vm1392, %v1386, %v981
        %v1420 = vsel %vm1392, %v1387, %v983
        %v1421 = vsel %vm1392, %v1388, %v985
        %v1422 = vsel %vm1392, %v1389, %v987
        %v1423 = vsel %vm1392, %v1390, %v989
        %v1424 = vsel %vm1392, %v1391, %v991
        %vm1425 = vcmask 228352
        %v1426 = vsel %vm1425, %v1393, %v1031
        %v1427 = vsel %vm1425, %v1394, %v1033
        %v1428 = vsel %vm1425, %v1395, %v1035
        %v1429 = vsel %vm1425, %v1396, %v1037
        %v1430 = vsel %vm1425, %v1397, %v1039
        %v1431 = vsel %vm1425, %v1398, %v1041
        %v1432 = vsel %vm1425, %v1399, %v1043
        %v1433 = vsel %vm1425, %v1400, %v1045
        %v1434 = vsel %vm1425, %v1401, %v1047
        %v1435 = vsel %vm1425, %v1402, %v1049
        %v1436 = vsel %vm1425, %v1403, %v1051
        %v1437 = vsel %vm1425, %v1404, %v1053
        %v1438 = vsel %vm1425, %v1405, %v1055
        %v1439 = vsel %vm1425, %v1406, %v1057
        %v1440 = vsel %vm1425, %v1407, %v1059
        %v1441 = vsel %vm1425, %v1408, %v1061
        %v1442 = vsel %vm1425, %v1409, %v1063
        %v1443 = vsel %vm1425, %v1410, %v1065
        %v1444 = vsel %vm1425, %v1411, %v1067
        %v1445 = vsel %vm1425, %v1412, %v1069
        %v1446 = vsel %vm1425, %v1413, %v1071
        %v1447 = vsel %vm1425, %v1414, %v1073
        %v1448 = vsel %vm1425, %v1415, %v1075
        %v1449 = vsel %vm1425, %v1416, %v1077
        %v1450 = vsel %vm1425, %v1417, %v1079
        %v1451 = vsel %vm1425, %v1418, %v1081
        %v1452 = vsel %vm1425, %v1419, %v1083
        %v1453 = vsel %vm1425, %v1420, %v1085
        %v1454 = vsel %vm1425, %v1421, %v1087
        %v1455 = vsel %vm1425, %v1422, %v1089
        %v1456 = vsel %vm1425, %v1423, %v1091
        %v1457 = vsel %vm1425, %v1424, %v1093
        %vm1458 = vcmask 261120
        %v1459 = vsel %vm1458, %v1426, %v1132
        %v1460 = vsel %vm1458, %v1427, %v1134
        %v1461 = vsel %vm1458, %v1428, %v1136
        %v1462 = vsel %vm1458, %v1429, %v1138
        %v1463 = vsel %vm1458, %v1430, %v1140
        %v1464 = vsel %vm1458, %v1431, %v1142
        %v1465 = vsel %vm1458, %v1432, %v1144
        %v1466 = vsel %vm1458, %v1433, %v1146
        %v1467 = vsel %vm1458, %v1434, %v1148
        %v1468 = vsel %vm1458, %v1435, %v1150
        %v1469 = vsel %vm1458, %v1436, %v1152
        %v1470 = vsel %vm1458, %v1437, %v1154
        %v1471 = vsel %vm1458, %v1438, %v1156
        %v1472 = vsel %vm1458, %v1439, %v1158
        %v1473 = vsel %vm1458, %v1440, %v1160
        %v1474 = vsel %vm1458, %v1441, %v1162
        %v1475 = vsel %vm1458, %v1442, %v1164
        %v1476 = vsel %vm1458, %v1443, %v1166
        %v1477 = vsel %vm1458, %v1444, %v1168
        %v1478 = vsel %vm1458, %v1445, %v1170
        %v1479 = vsel %vm1458, %v1446, %v1172
        %v1480 = vsel %vm1458, %v1447, %v1174
        %v1481 = vsel %vm1458, %v1448, %v1176
        %v1482 = vsel %vm1458, %v1449, %v1178
        %v1483 = vsel %vm1458, %v1450, %v1180
        %v1484 = vsel %vm1458, %v1451, %v1182
        %v1485 = vsel %vm1458, %v1452, %v1184
        %v1486 = vsel %vm1458, %v1453, %v1186
        %v1487 = vsel %vm1458, %v1454, %v1188
        %v1488 = vsel %vm1458, %v1455, %v1190
        %v1489 = vsel %vm1458, %v1456, %v1192
        %v1490 = vsel %vm1458, %v1457, %v1194
        %v1491 = vld [vmem:[%s1] sm:$0xff]
        %v1492 = vld [vmem:[%s1 + $0x8] sm:$0xff]
        %v1493 = vld [vmem:[%s1 + $0x10] sm:$0xff]
        %v1494 = vld [vmem:[%s1 + $0x18] sm:$0xff]
        %v1495 = vld [vmem:[%s1 + $0x20] sm:$0xf]
        %v1496 = vld [vmem:[%s2] sm:$0x1]
        %v1498 = vlaneseq
        %v1499 = vshrl.u32 %v1498, 7
        %v1500 = vsub.s32 0, %v1499
        %v1501 = vrot.slane %v1496, %v1500
        %vm1503 = vcmask 293888
        %v1505 = vsel %vm1503, %v1459, 0
        %v1508 = vsel %vm1503, %v1460, 0
        %v1511 = vsel %vm1503, %v1461, 0
        %v1514 = vsel %vm1503, %v1462, 0
        %v1517 = vsel %vm1503, %v1463, 0
        %v1520 = vsel %vm1503, %v1464, 0
        %v1523 = vsel %vm1503, %v1465, 0
        %v1526 = vsel %vm1503, %v1466, 0
        %v1529 = vsel %vm1503, %v1467, 0
        %v1532 = vsel %vm1503, %v1468, 0
        %v1535 = vsel %vm1503, %v1469, 0
        %v1538 = vsel %vm1503, %v1470, 0
        %v1541 = vsel %vm1503, %v1471, 0
        %v1544 = vsel %vm1503, %v1472, 0
        %v1547 = vsel %vm1503, %v1473, 0
        %v1550 = vsel %vm1503, %v1474, 0
        %v1553 = vsel %vm1503, %v1475, 0
        %v1556 = vsel %vm1503, %v1476, 0
        %v1559 = vsel %vm1503, %v1477, 0
        %v1562 = vsel %vm1503, %v1478, 0
        %v1565 = vsel %vm1503, %v1479, 0
        %v1568 = vsel %vm1503, %v1480, 0
        %v1571 = vsel %vm1503, %v1481, 0
        %v1574 = vsel %vm1503, %v1482, 0
        %v1577 = vsel %vm1503, %v1483, 0
        %v1580 = vsel %vm1503, %v1484, 0
        %v1583 = vsel %vm1503, %v1485, 0
        %v1586 = vsel %vm1503, %v1486, 0
        %v1589 = vsel %vm1503, %v1487, 0
        %v1592 = vsel %vm1503, %v1488, 0
        %v1595 = vsel %vm1503, %v1489, 0
        %v1598 = vsel %vm1503, %v1490, 0
        %vm1600 = vcmask 1043456
        %v1602 = vsel %vm1600, %v1495, 0
        %1604 = vmatprep.subr.mxu0 0.0
        %1605 = vmatpush1.msra.mxu0 %v1491
        %1606 = vmatprep.subr.mxu0 0.0
        %1607 = vmatpush1.msra.mxu0 %v1492
        %1608 = vmatprep.subr.mxu0 0.0
        %1609 = vmatpush1.msra.mxu0 %v1493
        %1610 = vmatprep.subr.mxu0 0.0
        %1611 = vmatpush1.msra.mxu0 %v1494
        %1612 = vmatprep.subr.mxu0 0.0
        %1613 = vmatpush1.msra.mxu0 %v1602
        %1614 = vmatprep.subr.mxu0 0.0
        %1615 = vmatpush1.msra.mxu0 0.0
        %1616 = vmatprep.subr.mxu0 0.0
        %1617 = vmatpush1.msra.mxu0 0.0
        %1618 = vmatprep.subr.mxu0 0.0
        %1619 = vmatpush1.msra.mxu0 0.0
        %1620 = vmatprep.subr.mxu0 0.0
        %1621 = vmatpush1.msra.mxu0 0.0
        %1622 = vmatprep.subr.mxu0 0.0
        %1623 = vmatpush1.msra.mxu0 0.0
        %1624 = vmatprep.subr.mxu0 0.0
        %1625 = vmatpush1.msra.mxu0 0.0
        %1626 = vmatprep.subr.mxu0 0.0
        %1627 = vmatpush1.msra.mxu0 0.0
        %1628 = vmatprep.subr.mxu0 0.0
        %1629 = vmatpush1.msra.mxu0 0.0
        %1630 = vmatprep.subr.mxu0 0.0
        %1631 = vmatpush1.msra.mxu0 0.0
        %1632 = vmatprep.subr.mxu0 0.0
        %1633 = vmatpush1.msra.mxu0 0.0
        %1634 = vmatprep.subr.mxu0 0.0
        %1635 = vmatpush1.msra.mxu0 0.0
        %1636 = vmatprep.subr.mxu0 0.0
        %1637 = vmatpush1.msra.mxu0 0.0
        %1638 = vmatprep.subr.mxu0 0.0
        %1639 = vmatpush1.msra.mxu0 0.0
        %1640 = vmatprep.subr.mxu0 0.0
        %1641 = vmatpush1.msra.mxu0 0.0
        %1642 = vmatprep.subr.mxu0 0.0
        %1643 = vmatpush1.msra.mxu0 0.0
        %1644 = vmatprep.subr.mxu0 0.0
        %1645 = vmatpush1.msra.mxu0 0.0
        %1646 = vmatprep.subr.mxu0 0.0
        %1647 = vmatpush1.msra.mxu0 0.0
        %1648 = vmatprep.subr.mxu0 0.0
        %1649 = vmatpush1.msra.mxu0 0.0
        %1650 = vmatprep.subr.mxu0 0.0
        %1651 = vmatpush1.msra.mxu0 0.0
        %1652 = vmatprep.subr.mxu0 0.0
        %1653 = vmatpush1.msra.mxu0 0.0
        %1654 = vmatprep.subr.mxu0 0.0
        %1655 = vmatpush1.msra.mxu0 0.0
        %1656 = vmatprep.subr.mxu0 0.0
        %1657 = vmatpush1.msra.mxu0 0.0
        %1658 = vmatprep.subr.mxu0 0.0
        %1659 = vmatpush1.msra.mxu0 0.0
        %1660 = vmatprep.subr.mxu0 0.0
        %1661 = vmatpush1.msra.mxu0 0.0
        %1662 = vmatprep.subr.mxu0 0.0
        %1663 = vmatpush1.msra.mxu0 0.0
        %1664 = vmatprep.subr.mxu0 0.0
        %1665 = vmatpush1.msra.mxu0 0.0
        %1666 = vmatprep.subr.mxu0 0.0
        %1667 = vmatpush1.msra.mxu0 0.0
        %1668 = vmatprep.mubr.f32.mxu0 0.0
        %1669 = vmatmul.mubr.f32.gmra.mrb[0].mxu0 %v1505
        %v1670 = vpop.f32.mrb[0].mxu0
        %v1671 = vadd.f32 %v1501, %v1670
        %v1672 = vpop.f32.mrb[0].mxu0
        %1673 = vmatprep.mubr.f32.mxu0 0.0
        %1674 = vmatmul.mubr.f32.gmra.mrb[0].mxu0 %v1508
        %v1675 = vpop.f32.mrb[0].mxu0
        %v1676 = vadd.f32 %v1501, %v1675
        %v1677 = vpop.f32.mrb[0].mxu0
        %1678 = vmatprep.mubr.f32.mxu0 0.0
        %1679 = vmatmul.mubr.f32.gmra.mrb[0].mxu0 %v1511
        %v1680 = vpop.f32.mrb[0].mxu0
        %v1681 = vadd.f32 %v1501, %v1680
        %v1682 = vpop.f32.mrb[0].mxu0
        %1683 = vmatprep.mubr.f32.mxu0 0.0
        %1684 = vmatmul.mubr.f32.gmra.mrb[0].mxu0 %v1514
        %v1685 = vpop.f32.mrb[0].mxu0
        %v1686 = vadd.f32 %v1501, %v1685
        %v1687 = vpop.f32.mrb[0].mxu0
        %1688 = vmatprep.mubr.f32.mxu0 0.0
        %1689 = vmatmul.mubr.f32.gmra.mrb[0].mxu0 %v1517
        %v1690 = vpop.f32.mrb[0].mxu0
        %v1691 = vadd.f32 %v1501, %v1690
        %v1692 = vpop.f32.mrb[0].mxu0
        %1693 = vmatprep.mubr.f32.mxu0 0.0
        %1694 = vmatmul.mubr.f32.gmra.mrb[0].mxu0 %v1520
        %v1695 = vpop.f32.mrb[0].mxu0
        %v1696 = vadd.f32 %v1501, %v1695
        %v1697 = vpop.f32.mrb[0].mxu0
        %1698 = vmatprep.mubr.f32.mxu0 0.0
        %1699 = vmatmul.mubr.f32.gmra.mrb[0].mxu0 %v1523
        %v1700 = vpop.f32.mrb[0].mxu0
        %v1701 = vadd.f32 %v1501, %v1700
        %v1702 = vpop.f32.mrb[0].mxu0
        %1703 = vmatprep.mubr.f32.mxu0 0.0
        %1704 = vmatmul.mubr.f32.gmra.mrb[0].mxu0 %v1526
        %v1705 = vpop.f32.mrb[0].mxu0
        %v1706 = vadd.f32 %v1501, %v1705
        %v1707 = vpop.f32.mrb[0].mxu0
        %1708 = vmatprep.mubr.f32.mxu0 0.0
        %1709 = vmatmul.mubr.f32.gmra.mrb[0].mxu0 %v1529
        %v1710 = vpop.f32.mrb[0].mxu0
        %v1711 = vadd.f32 %v1501, %v1710
        %v1712 = vpop.f32.mrb[0].mxu0
        %1713 = vmatprep.mubr.f32.mxu0 0.0
        %1714 = vmatmul.mubr.f32.gmra.mrb[0].mxu0 %v1532
        %v1715 = vpop.f32.mrb[0].mxu0
        %v1716 = vadd.f32 %v1501, %v1715
        %v1717 = vpop.f32.mrb[0].mxu0
        %1718 = vmatprep.mubr.f32.mxu0 0.0
        %1719 = vmatmul.mubr.f32.gmra.mrb[0].mxu0 %v1535
        %v1720 = vpop.f32.mrb[0].mxu0
        %v1721 = vadd.f32 %v1501, %v1720
        %v1722 = vpop.f32.mrb[0].mxu0
        %1723 = vmatprep.mubr.f32.mxu0 0.0
        %1724 = vmatmul.mubr.f32.gmra.mrb[0].mxu0 %v1538
        %v1725 = vpop.f32.mrb[0].mxu0
        %v1726 = vadd.f32 %v1501, %v1725
        %v1727 = vpop.f32.mrb[0].mxu0
        %1728 = vmatprep.mubr.f32.mxu0 0.0
        %1729 = vmatmul.mubr.f32.gmra.mrb[0].mxu0 %v1541
        %v1730 = vpop.f32.mrb[0].mxu0
        %v1731 = vadd.f32 %v1501, %v1730
        %v1732 = vpop.f32.mrb[0].mxu0
        %1733 = vmatprep.mubr.f32.mxu0 0.0
        %1734 = vmatmul.mubr.f32.gmra.mrb[0].mxu0 %v1544
        %v1735 = vpop.f32.mrb[0].mxu0
        %v1736 = vadd.f32 %v1501, %v1735
        %v1737 = vpop.f32.mrb[0].mxu0
        %1738 = vmatprep.mubr.f32.mxu0 0.0
        %1739 = vmatmul.mubr.f32.gmra.mrb[0].mxu0 %v1547
        %v1740 = vpop.f32.mrb[0].mxu0
        %v1741 = vadd.f32 %v1501, %v1740
        %v1742 = vpop.f32.mrb[0].mxu0
        %1743 = vmatprep.mubr.f32.mxu0 0.0
        %1744 = vmatmul.mubr.f32.gmra.mrb[0].mxu0 %v1550
        %v1745 = vpop.f32.mrb[0].mxu0
        %v1746 = vadd.f32 %v1501, %v1745
        %v1747 = vpop.f32.mrb[0].mxu0
        %1748 = vmatprep.mubr.f32.mxu0 0.0
        %1749 = vmatmul.mubr.f32.gmra.mrb[0].mxu0 %v1553
        %v1750 = vpop.f32.mrb[0].mxu0
        %v1751 = vadd.f32 %v1501, %v1750
        %v1752 = vpop.f32.mrb[0].mxu0
        %1753 = vmatprep.mubr.f32.mxu0 0.0
        %1754 = vmatmul.mubr.f32.gmra.mrb[0].mxu0 %v1556
        %v1755 = vpop.f32.mrb[0].mxu0
        %v1756 = vadd.f32 %v1501, %v1755
        %v1757 = vpop.f32.mrb[0].mxu0
        %1758 = vmatprep.mubr.f32.mxu0 0.0
        %1759 = vmatmul.mubr.f32.gmra.mrb[0].mxu0 %v1559
        %v1760 = vpop.f32.mrb[0].mxu0
        %v1761 = vadd.f32 %v1501, %v1760
        %v1762 = vpop.f32.mrb[0].mxu0
        %1763 = vmatprep.mubr.f32.mxu0 0.0
        %1764 = vmatmul.mubr.f32.gmra.mrb[0].mxu0 %v1562
        %v1765 = vpop.f32.mrb[0].mxu0
        %v1766 = vadd.f32 %v1501, %v1765
        %v1767 = vpop.f32.mrb[0].mxu0
        %1768 = vmatprep.mubr.f32.mxu0 0.0
        %1769 = vmatmul.mubr.f32.gmra.mrb[0].mxu0 %v1565
        %v1770 = vpop.f32.mrb[0].mxu0
        %v1771 = vadd.f32 %v1501, %v1770
        %v1772 = vpop.f32.mrb[0].mxu0
        %1773 = vmatprep.mubr.f32.mxu0 0.0
        %1774 = vmatmul.mubr.f32.gmra.mrb[0].mxu0 %v1568
        %v1775 = vpop.f32.mrb[0].mxu0
        %v1776 = vadd.f32 %v1501, %v1775
        %v1777 = vpop.f32.mrb[0].mxu0
        %1778 = vmatprep.mubr.f32.mxu0 0.0
        %1779 = vmatmul.mubr.f32.gmra.mrb[0].mxu0 %v1571
        %v1780 = vpop.f32.mrb[0].mxu0
        %v1781 = vadd.f32 %v1501, %v1780
        %v1782 = vpop.f32.mrb[0].mxu0
        %1783 = vmatprep.mubr.f32.mxu0 0.0
        %1784 = vmatmul.mubr.f32.gmra.mrb[0].mxu0 %v1574
        %v1785 = vpop.f32.mrb[0].mxu0
        %v1786 = vadd.f32 %v1501, %v1785
        %v1787 = vpop.f32.mrb[0].mxu0
        %1788 = vmatprep.mubr.f32.mxu0 0.0
        %1789 = vmatmul.mubr.f32.gmra.mrb[0].mxu0 %v1577
        %v1790 = vpop.f32.mrb[0].mxu0
        %v1791 = vadd.f32 %v1501, %v1790
        %v1792 = vpop.f32.mrb[0].mxu0
        %1793 = vmatprep.mubr.f32.mxu0 0.0
        %1794 = vmatmul.mubr.f32.gmra.mrb[0].mxu0 %v1580
        %v1795 = vpop.f32.mrb[0].mxu0
        %v1796 = vadd.f32 %v1501, %v1795
        %v1797 = vpop.f32.mrb[0].mxu0
        %1798 = vmatprep.mubr.f32.mxu0 0.0
        %1799 = vmatmul.mubr.f32.gmra.mrb[0].mxu0 %v1583
        %v1800 = vpop.f32.mrb[0].mxu0
        %v1801 = vadd.f32 %v1501, %v1800
        %v1802 = vpop.f32.mrb[0].mxu0
        %1803 = vmatprep.mubr.f32.mxu0 0.0
        %1804 = vmatmul.mubr.f32.gmra.mrb[0].mxu0 %v1586
        %v1805 = vpop.f32.mrb[0].mxu0
        %v1806 = vadd.f32 %v1501, %v1805
        %v1807 = vpop.f32.mrb[0].mxu0
        %1808 = vmatprep.mubr.f32.mxu0 0.0
        %1809 = vmatmul.mubr.f32.gmra.mrb[0].mxu0 %v1589
        %v1810 = vpop.f32.mrb[0].mxu0
        %v1811 = vadd.f32 %v1501, %v1810
        %v1812 = vpop.f32.mrb[0].mxu0
        %1813 = vmatprep.mubr.f32.mxu0 0.0
        %1814 = vmatmul.mubr.f32.gmra.mrb[0].mxu0 %v1592
        %v1815 = vpop.f32.mrb[0].mxu0
        %v1816 = vadd.f32 %v1501, %v1815
        %v1817 = vpop.f32.mrb[0].mxu0
        %1818 = vmatprep.mubr.f32.mxu0 0.0
        %1819 = vmatmul.mubr.f32.gmra.mrb[0].mxu0 %v1595
        %v1820 = vpop.f32.mrb[0].mxu0
        %v1821 = vadd.f32 %v1501, %v1820
        %v1822 = vpop.f32.mrb[0].mxu0
        %1823 = vmatprep.mubr.f32.mxu0 0.0
        %1824 = vmatmul.mubr.f32.gmra.mrb[0].mxu0 %v1598
        %v1825 = vpop.f32.mrb[0].mxu0
        %v1826 = vadd.f32 %v1501, %v1825
        %v1827 = vpop.f32.mrb[0].mxu0
        %1828 = vdwg.mxu0
        %v1829 = vadd.f32 %v1671, %v1676
        %v1830 = vadd.f32 %v1829, %v1681
        %v1831 = vadd.f32 %v1830, %v1686
        %v1832 = vadd.f32 %v1831, %v1691
        %v1833 = vadd.f32 %v1832, %v1696
        %v1834 = vadd.f32 %v1833, %v1701
        %v1835 = vadd.f32 %v1834, %v1706
        %v1836 = vadd.f32 %v1835, %v1711
        %v1837 = vadd.f32 %v1836, %v1716
        %v1838 = vadd.f32 %v1837, %v1721
        %v1839 = vadd.f32 %v1838, %v1726
        %v1840 = vadd.f32 %v1839, %v1731
        %v1841 = vadd.f32 %v1840, %v1736
        %v1842 = vadd.f32 %v1841, %v1741
        %v1843 = vadd.f32 %v1842, %v1746
        %v1844 = vadd.f32 %v1843, %v1751
        %v1845 = vadd.f32 %v1844, %v1756
        %v1846 = vadd.f32 %v1845, %v1761
        %v1847 = vadd.f32 %v1846, %v1766
        %v1848 = vadd.f32 %v1847, %v1771
        %v1849 = vadd.f32 %v1848, %v1776
        %v1850 = vadd.f32 %v1849, %v1781
        %v1851 = vadd.f32 %v1850, %v1786
        %v1852 = vadd.f32 %v1851, %v1791
        %v1853 = vadd.f32 %v1852, %v1796
        %v1854 = vadd.f32 %v1853, %v1801
        %v1855 = vadd.f32 %v1854, %v1806
        %v1856 = vadd.f32 %v1855, %v1811
        %v1857 = vadd.f32 %v1856, %v1816
        %v1858 = vadd.f32 %v1857, %v1821
        %v1859 = vadd.f32 %v1858, %v1826
        %v1860 = vrot.slane %v1859, 4
        %v1861 = vadd.f32 %v1859, %v1860
        %v1862 = vrot.slane %v1861, 2
        %v1863 = vadd.f32 %v1861, %v1862
        %v1864 = vrot.slane %v1863, 1
        %v1865 = vadd.f32 %v1863, %v1864
        %v1866 = vmul.f32 %v1865, 0.00390625
        %v1867 = vmul.f32 %v1671, %v1671
        %v1868 = vmul.f32 %v1676, %v1676
        %v1869 = vmul.f32 %v1681, %v1681
        %v1870 = vmul.f32 %v1686, %v1686
        %v1871 = vmul.f32 %v1691, %v1691
        %v1872 = vmul.f32 %v1696, %v1696
        %v1873 = vmul.f32 %v1701, %v1701
        %v1874 = vmul.f32 %v1706, %v1706
        %v1875 = vmul.f32 %v1711, %v1711
        %v1876 = vmul.f32 %v1716, %v1716
        %v1877 = vmul.f32 %v1721, %v1721
        %v1878 = vmul.f32 %v1726, %v1726
        %v1879 = vmul.f32 %v1731, %v1731
        %v1880 = vmul.f32 %v1736, %v1736
        %v1881 = vmul.f32 %v1741, %v1741
        %v1882 = vmul.f32 %v1746, %v1746
        %v1883 = vmul.f32 %v1751, %v1751
        %v1884 = vmul.f32 %v1756, %v1756
        %v1885 = vmul.f32 %v1761, %v1761
        %v1886 = vmul.f32 %v1766, %v1766
        %v1887 = vmul.f32 %v1771, %v1771
        %v1888 = vmul.f32 %v1776, %v1776
        %v1889 = vmul.f32 %v1781, %v1781
        %v1890 = vmul.f32 %v1786, %v1786
        %v1891 = vmul.f32 %v1791, %v1791
        %v1892 = vmul.f32 %v1796, %v1796
        %v1893 = vmul.f32 %v1801, %v1801
        %v1894 = vmul.f32 %v1806, %v1806
        %v1895 = vmul.f32 %v1811, %v1811
        %v1896 = vmul.f32 %v1816, %v1816
        %v1897 = vmul.f32 %v1821, %v1821
        %v1898 = vmul.f32 %v1826, %v1826
        %v1899 = vadd.f32 %v1867, %v1868
        %v1900 = vadd.f32 %v1899, %v1869
        %v1901 = vadd.f32 %v1900, %v1870
        %v1902 = vadd.f32 %v1901, %v1871
        %v1903 = vadd.f32 %v1902, %v1872
        %v1904 = vadd.f32 %v1903, %v1873
        %v1905 = vadd.f32 %v1904, %v1874
        %v1906 = vadd.f32 %v1905, %v1875
        %v1907 = vadd.f32 %v1906, %v1876
        %v1908 = vadd.f32 %v1907, %v1877
        %v1909 = vadd.f32 %v1908, %v1878
        %v1910 = vadd.f32 %v1909, %v1879
        %v1911 = vadd.f32 %v1910, %v1880
        %v1912 = vadd.f32 %v1911, %v1881
        %v1913 = vadd.f32 %v1912, %v1882
        %v1914 = vadd.f32 %v1913, %v1883
        %v1915 = vadd.f32 %v1914, %v1884
        %v1916 = vadd.f32 %v1915, %v1885
        %v1917 = vadd.f32 %v1916, %v1886
        %v1918 = vadd.f32 %v1917, %v1887
        %v1919 = vadd.f32 %v1918, %v1888
        %v1920 = vadd.f32 %v1919, %v1889
        %v1921 = vadd.f32 %v1920, %v1890
        %v1922 = vadd.f32 %v1921, %v1891
        %v1923 = vadd.f32 %v1922, %v1892
        %v1924 = vadd.f32 %v1923, %v1893
        %v1925 = vadd.f32 %v1924, %v1894
        %v1926 = vadd.f32 %v1925, %v1895
        %v1927 = vadd.f32 %v1926, %v1896
        %v1928 = vadd.f32 %v1927, %v1897
        %v1929 = vadd.f32 %v1928, %v1898
        %v1930 = vrot.slane %v1929, 4
        %v1931 = vadd.f32 %v1929, %v1930
        %v1932 = vrot.slane %v1931, 2
        %v1933 = vadd.f32 %v1931, %v1932
        %v1934 = vrot.slane %v1933, 1
        %v1935 = vadd.f32 %v1933, %v1934
        %v1936 = vmul.f32 %v1935, 0.00390625
        %v1937 = vmul.f32 %v1866, %v1866
        %v1938 = vsub.f32 %v1936, %v1937
        %v1939 = vmax.f32 %v1938, 0.0
        %v1940 = vsub.f32 %v1671, %v1866
        %v1941 = vsub.f32 %v1676, %v1866
        %v1942 = vsub.f32 %v1681, %v1866
        %v1943 = vsub.f32 %v1686, %v1866
        %v1944 = vsub.f32 %v1691, %v1866
        %v1945 = vsub.f32 %v1696, %v1866
        %v1946 = vsub.f32 %v1701, %v1866
        %v1947 = vsub.f32 %v1706, %v1866
        %v1948 = vsub.f32 %v1711, %v1866
        %v1949 = vsub.f32 %v1716, %v1866
        %v1950 = vsub.f32 %v1721, %v1866
        %v1951 = vsub.f32 %v1726, %v1866
        %v1952 = vsub.f32 %v1731, %v1866
        %v1953 = vsub.f32 %v1736, %v1866
        %v1954 = vsub.f32 %v1741, %v1866
        %v1955 = vsub.f32 %v1746, %v1866
        %v1956 = vsub.f32 %v1751, %v1866
        %v1957 = vsub.f32 %v1756, %v1866
        %v1958 = vsub.f32 %v1761, %v1866
        %v1959 = vsub.f32 %v1766, %v1866
        %v1960 = vsub.f32 %v1771, %v1866
        %v1961 = vsub.f32 %v1776, %v1866
        %v1962 = vsub.f32 %v1781, %v1866
        %v1963 = vsub.f32 %v1786, %v1866
        %v1964 = vsub.f32 %v1791, %v1866
        %v1965 = vsub.f32 %v1796, %v1866
        %v1966 = vsub.f32 %v1801, %v1866
        %v1967 = vsub.f32 %v1806, %v1866
        %v1968 = vsub.f32 %v1811, %v1866
        %v1969 = vsub.f32 %v1816, %v1866
        %v1970 = vsub.f32 %v1821, %v1866
        %v1971 = vsub.f32 %v1826, %v1866
        %v1972 = vadd.f32 %v1939, 1e-05
        %v1973 = vrsqrt.pop %v1972
        %v1974 = vmul.f32 %v1940, %v1973
        %v1975 = vmul.f32 %v1941, %v1973
        %v1976 = vmul.f32 %v1942, %v1973
        %v1977 = vmul.f32 %v1943, %v1973
        %v1978 = vmul.f32 %v1944, %v1973
        %v1979 = vmul.f32 %v1945, %v1973
        %v1980 = vmul.f32 %v1946, %v1973
        %v1981 = vmul.f32 %v1947, %v1973
        %v1982 = vmul.f32 %v1948, %v1973
        %v1983 = vmul.f32 %v1949, %v1973
        %v1984 = vmul.f32 %v1950, %v1973
        %v1985 = vmul.f32 %v1951, %v1973
        %v1986 = vmul.f32 %v1952, %v1973
        %v1987 = vmul.f32 %v1953, %v1973
        %v1988 = vmul.f32 %v1954, %v1973
        %v1989 = vmul.f32 %v1955, %v1973
        %v1990 = vmul.f32 %v1956, %v1973
        %v1991 = vmul.f32 %v1957, %v1973
        %v1992 = vmul.f32 %v1958, %v1973
        %v1993 = vmul.f32 %v1959, %v1973
        %v1994 = vmul.f32 %v1960, %v1973
        %v1995 = vmul.f32 %v1961, %v1973
        %v1996 = vmul.f32 %v1962, %v1973
        %v1997 = vmul.f32 %v1963, %v1973
        %v1998 = vmul.f32 %v1964, %v1973
        %v1999 = vmul.f32 %v1965, %v1973
        %v2000 = vmul.f32 %v1966, %v1973
        %v2001 = vmul.f32 %v1967, %v1973
        %v2002 = vmul.f32 %v1968, %v1973
        %v2003 = vmul.f32 %v1969, %v1973
        %v2004 = vmul.f32 %v1970, %v1973
        %v2005 = vmul.f32 %v1971, %v1973
        %vm2006 = vcmp.gt.f32.partialorder %v1974, 0.0
        %vm2007 = vcmp.gt.f32.partialorder %v1975, 0.0
        %vm2008 = vcmp.gt.f32.partialorder %v1976, 0.0
        %vm2009 = vcmp.gt.f32.partialorder %v1977, 0.0
        %vm2010 = vcmp.gt.f32.partialorder %v1978, 0.0
        %vm2011 = vcmp.gt.f32.partialorder %v1979, 0.0
        %vm2012 = vcmp.gt.f32.partialorder %v1980, 0.0
        %vm2013 = vcmp.gt.f32.partialorder %v1981, 0.0
        %vm2014 = vcmp.gt.f32.partialorder %v1982, 0.0
        %vm2015 = vcmp.gt.f32.partialorder %v1983, 0.0
        %vm2016 = vcmp.gt.f32.partialorder %v1984, 0.0
        %vm2017 = vcmp.gt.f32.partialorder %v1985, 0.0
        %vm2018 = vcmp.gt.f32.partialorder %v1986, 0.0
        %vm2019 = vcmp.gt.f32.partialorder %v1987, 0.0
        %vm2020 = vcmp.gt.f32.partialorder %v1988, 0.0
        %vm2021 = vcmp.gt.f32.partialorder %v1989, 0.0
        %vm2022 = vcmp.gt.f32.partialorder %v1990, 0.0
        %vm2023 = vcmp.gt.f32.partialorder %v1991, 0.0
        %vm2024 = vcmp.gt.f32.partialorder %v1992, 0.0
        %vm2025 = vcmp.gt.f32.partialorder %v1993, 0.0
        %vm2026 = vcmp.gt.f32.partialorder %v1994, 0.0
        %vm2027 = vcmp.gt.f32.partialorder %v1995, 0.0
        %vm2028 = vcmp.gt.f32.partialorder %v1996, 0.0
        %vm2029 = vcmp.gt.f32.partialorder %v1997, 0.0
        %vm2030 = vcmp.gt.f32.partialorder %v1998, 0.0
        %vm2031 = vcmp.gt.f32.partialorder %v1999, 0.0
        %vm2032 = vcmp.gt.f32.partialorder %v2000, 0.0
        %vm2033 = vcmp.gt.f32.partialorder %v2001, 0.0
        %vm2034 = vcmp.gt.f32.partialorder %v2002, 0.0
        %vm2035 = vcmp.gt.f32.partialorder %v2003, 0.0
        %vm2036 = vcmp.gt.f32.partialorder %v2004, 0.0
        %vm2037 = vcmp.gt.f32.partialorder %v2005, 0.0
        %v2038 = vmul.f32 %v1974, 0.2
        %v2039 = vmul.f32 %v1975, 0.2
        %v2040 = vmul.f32 %v1976, 0.2
        %v2041 = vmul.f32 %v1977, 0.2
        %v2042 = vmul.f32 %v1978, 0.2
        %v2043 = vmul.f32 %v1979, 0.2
        %v2044 = vmul.f32 %v1980, 0.2
        %v2045 = vmul.f32 %v1981, 0.2
        %v2046 = vmul.f32 %v1982, 0.2
        %v2047 = vmul.f32 %v1983, 0.2
        %v2048 = vmul.f32 %v1984, 0.2
        %v2049 = vmul.f32 %v1985, 0.2
        %v2050 = vmul.f32 %v1986, 0.2
        %v2051 = vmul.f32 %v1987, 0.2
        %v2052 = vmul.f32 %v1988, 0.2
        %v2053 = vmul.f32 %v1989, 0.2
        %v2054 = vmul.f32 %v1990, 0.2
        %v2055 = vmul.f32 %v1991, 0.2
        %v2056 = vmul.f32 %v1992, 0.2
        %v2057 = vmul.f32 %v1993, 0.2
        %v2058 = vmul.f32 %v1994, 0.2
        %v2059 = vmul.f32 %v1995, 0.2
        %v2060 = vmul.f32 %v1996, 0.2
        %v2061 = vmul.f32 %v1997, 0.2
        %v2062 = vmul.f32 %v1998, 0.2
        %v2063 = vmul.f32 %v1999, 0.2
        %v2064 = vmul.f32 %v2000, 0.2
        %v2065 = vmul.f32 %v2001, 0.2
        %v2066 = vmul.f32 %v2002, 0.2
        %v2067 = vmul.f32 %v2003, 0.2
        %v2068 = vmul.f32 %v2004, 0.2
        %v2069 = vmul.f32 %v2005, 0.2
        %v2070 = vsel %vm2006, %v1974, %v2038
        %v2071 = vsel %vm2007, %v1975, %v2039
        %v2072 = vsel %vm2008, %v1976, %v2040
        %v2073 = vsel %vm2009, %v1977, %v2041
        %v2074 = vsel %vm2010, %v1978, %v2042
        %v2075 = vsel %vm2011, %v1979, %v2043
        %v2076 = vsel %vm2012, %v1980, %v2044
        %v2077 = vsel %vm2013, %v1981, %v2045
        %v2078 = vsel %vm2014, %v1982, %v2046
        %v2079 = vsel %vm2015, %v1983, %v2047
        %v2080 = vsel %vm2016, %v1984, %v2048
        %v2081 = vsel %vm2017, %v1985, %v2049
        %v2082 = vsel %vm2018, %v1986, %v2050
        %v2083 = vsel %vm2019, %v1987, %v2051
        %v2084 = vsel %vm2020, %v1988, %v2052
        %v2085 = vsel %vm2021, %v1989, %v2053
        %v2086 = vsel %vm2022, %v1990, %v2054
        %v2087 = vsel %vm2023, %v1991, %v2055
        %v2088 = vsel %vm2024, %v1992, %v2056
        %v2089 = vsel %vm2025, %v1993, %v2057
        %v2090 = vsel %vm2026, %v1994, %v2058
        %v2091 = vsel %vm2027, %v1995, %v2059
        %v2092 = vsel %vm2028, %v1996, %v2060
        %v2093 = vsel %vm2029, %v1997, %v2061
        %v2094 = vsel %vm2030, %v1998, %v2062
        %v2095 = vsel %vm2031, %v1999, %v2063
        %v2096 = vsel %vm2032, %v2000, %v2064
        %v2097 = vsel %vm2033, %v2001, %v2065
        %v2098 = vsel %vm2034, %v2002, %v2066
        %v2099 = vsel %vm2035, %v2003, %v2067
        %v2100 = vsel %vm2036, %v2004, %v2068
        %v2101 = vsel %vm2037, %v2005, %v2069
        %2102 = vst [vmem:[%s163] sm:$0xff] %v2070
        %2103 = vst [vmem:[%s163 + $0x8] sm:$0xff] %v2071
        %2104 = vst [vmem:[%s163 + $0x10] sm:$0xff] %v2072
        %2105 = vst [vmem:[%s163 + $0x18] sm:$0xff] %v2073
        %2106 = vst [vmem:[%s163 + $0x20] sm:$0xff] %v2074
        %2107 = vst [vmem:[%s163 + $0x28] sm:$0xff] %v2075
        %2108 = vst [vmem:[%s163 + $0x30] sm:$0xff] %v2076
        %2109 = vst [vmem:[%s163 + $0x38] sm:$0xff] %v2077
        %2110 = vst [vmem:[%s163 + $0x40] sm:$0xff] %v2078
        %2111 = vst [vmem:[%s163 + $0x48] sm:$0xff] %v2079
        %2112 = vst [vmem:[%s163 + $0x50] sm:$0xff] %v2080
        %2113 = vst [vmem:[%s163 + $0x58] sm:$0xff] %v2081
        %2114 = vst [vmem:[%s163 + $0x60] sm:$0xff] %v2082
        %2115 = vst [vmem:[%s163 + $0x68] sm:$0xff] %v2083
        %2116 = vst [vmem:[%s163 + $0x70] sm:$0xff] %v2084
        %2117 = vst [vmem:[%s163 + $0x78] sm:$0xff] %v2085
        %2118 = vst [vmem:[%s163 + $0x80] sm:$0xff] %v2086
        %2119 = vst [vmem:[%s163 + $0x88] sm:$0xff] %v2087
        %2120 = vst [vmem:[%s163 + $0x90] sm:$0xff] %v2088
        %2121 = vst [vmem:[%s163 + $0x98] sm:$0xff] %v2089
        %2122 = vst [vmem:[%s163 + $0xa0] sm:$0xff] %v2090
        %2123 = vst [vmem:[%s163 + $0xa8] sm:$0xff] %v2091
        %2124 = vst [vmem:[%s163 + $0xb0] sm:$0xff] %v2092
        %2125 = vst [vmem:[%s163 + $0xb8] sm:$0xff] %v2093
        %2126 = vst [vmem:[%s163 + $0xc0] sm:$0xff] %v2094
        %2127 = vst [vmem:[%s163 + $0xc8] sm:$0xff] %v2095
        %2128 = vst [vmem:[%s163 + $0xd0] sm:$0xff] %v2096
        %2129 = vst [vmem:[%s163 + $0xd8] sm:$0xff] %v2097
        %2130 = vst [vmem:[%s163 + $0xe0] sm:$0xff] %v2098
        %2131 = vst [vmem:[%s163 + $0xe8] sm:$0xff] %v2099
        %2132 = vst [vmem:[%s163 + $0xf0] sm:$0xff] %v2100
        %2133 = vst [vmem:[%s163 + $0xf8] sm:$0xff] %v2101
        %s2134 = sand.u32 %s93, 1
        %s2135 = scalar_lea.sflag [#allocation3], %s2134
        %s2136 = sand.u32 %s93, 1
        %s2137 = smul.addr %s2136, 256
        %s2138 = scalar_lea.vmem [#allocation2], %s2137
        // Predicated region
        $region33: #{tpu_custom_call.1} parent=31 // pred_check
          %p2139 = pneg %p103
        $region34: #{tpu_custom_call.1} parent=31 // pred_check_branch
          %2141 = sbr.rel (%p2139) target = $region36
        $region35: #{tpu_custom_call.1} parent=31 // pred_region
          %s2143 = ssub.s32 4096, 4096
          %2144 = vsyncadd %s2135, %s2143
          %s2145 = smul.addr %s17, 32
          %s2146 = smul.addr %s2145, 128
          %s2147 = scalar_lea.hbm %s3, %s2146
          %s2148 = sshll.u32 %s2138, 4
          %s2149 = int_to_ptr.vmem [resolvable:$true] %s2148
          %2154 = dma.vmem_to_hbm [thread:$0]  %s2149, 4096, %s2147, %s2135, 128, 128, 8
        $region36: #{tpu_custom_call.1} parent=31 // pred_fallthru
          _
      $region32: #{tpu_custom_call.1} parent=5 // pred_fallthru
        _
      %p2155 = scmp.le.s32.totalorder 2, %s12
      // Predicated region
      $region37: #{tpu_custom_call.1} parent=5 // pred_check
        %p2156 = pneg %p2155
      $region38: #{tpu_custom_call.1} parent=5 // pred_check_branch
        %2158 = sbr.rel (%p2156) target = $region40
      $region39: #{tpu_custom_call.1} parent=5 // pred_region
        %s2159 = ssub.s32 %s12, 2
        // Predicated region
        $region41: #{tpu_custom_call.1} parent=39 // pred_check
          %p2160 = pneg %p109
        $region42: #{tpu_custom_call.1} parent=39 // pred_check_branch
          %2162 = sbr.rel (%p2160) target = $region44
        $region43: #{tpu_custom_call.1} parent=39 // pred_region
          %s2163 = sand.u32 %s94, 1
          %s2164 = scalar_lea.sflag [#allocation3], %s2163
          %s2165 = sand.u32 %s94, 1
          %s2166 = smul.addr %s2165, 256
          %s2167 = scalar_lea.vmem [#allocation2], %s2166
          %2168 = dma.done %s2164, 4096
        $region44: #{tpu_custom_call.1} parent=39 // pred_fallthru
          _
      $region40: #{tpu_custom_call.1} parent=5 // pred_fallthru
        _
    $region6: #{tpu_custom_call.1} parent=1 // loop_footer
      %s16 = sadd.s32 1, %s12
    $region7: #{tpu_custom_call.1} parent=1 // loop_footer_branch
      %11 = sbr.rel target = $region3
    $region8: #{tpu_custom_call.1} parent=1 // loop_exit
      _
    %2169 = vsyncpa [#allocation3], 1
    %s2170 = scalar_lea.sflag [#allocation3], 1
    %2171 = vsyncpa %s2170, 1

</llo_original>
